<compile_context>
chip_gen: v7x
topology: tpu7x:2x2x1
jax: 0.10.0
libtpu: 0.0.40
codegen_flags: <defaults>
</compile_context>

<pallas_src>
import math
from functools import partial

import jax
import jax.numpy as jnp
from jax import lax
from jax.experimental import pallas as pl
from jax.experimental.pallas import tpu as pltpu


# ------------------------------ tiling helpers ------------------------------

# Row tile target: multiple of 8 sublanes, >=512 to amortize the ~0.35us
# per-grid-step overhead, and <=~1024 so the fused MLP tile (x + 4E hidden
# live) also fits v7x's smaller 64 MiB VMEM.  For very large configs raise
# pltpu.CompilerParams(vmem_limit_bytes=...) together with a bigger tile on
# v5e/v6e (128 MiB VMEM).
ROW_TILE = 512

# Row axis is embarrassingly parallel -> lets Mosaic shard it across the two
# TensorCores on v7x (harmless on single-TC v5e/v6e).
_CP = pltpu.CompilerParams(dimension_semantics=("parallel",))


def _round_up(n, m):
    return ((n + m - 1) // m) * m


def _row_plan(M, target=ROW_TILE):
    tile = min(target, _round_up(M, 8))
    return tile, _round_up(M, tile)


def _pad_rows(x, Mp):
    M = x.shape[0]
    return x if M == Mp else jnp.pad(x, ((0, Mp - M), (0, 0)))


def _row_spec(tile, C):
    return pl.BlockSpec((tile, C), lambda i: (i, 0))


def _rep_spec(shape):
    # Weight/bias block == full array, constant index_map -> stays resident.
    return pl.BlockSpec(shape, lambda i: (0,) * len(shape))


def _bf(a):
    return a.astype(jnp.bfloat16)


_dot = partial(jnp.dot, preferred_element_type=jnp.float32)


def _ln(x, g, b, eps=1e-6):   # eps=1e-6 matches the reference norm_layer
    mu = jnp.mean(x, axis=-1, keepdims=True)
    xc = x - mu
    var = jnp.mean(xc * xc, axis=-1, keepdims=True)
    return xc * lax.rsqrt(var + eps) * g + b


# ----------------------------- Pallas kernels -----------------------------

def _linear_kernel(x_ref, w_ref, b_ref, o_ref):
    o_ref[...] = _dot(_bf(x_ref[...]), _bf(w_ref[...])) + b_ref[...]


def _layernorm_kernel(x_ref, g_ref, b_ref, o_ref):
    o_ref[...] = _ln(x_ref[...], g_ref[...], b_ref[...])


def _ln_linear_kernel(x_ref, g_ref, b_ref, w_ref, wb_ref, o_ref):
    # fused final LayerNorm + pointwise head
    xn = _ln(x_ref[...], g_ref[...], b_ref[...])
    o_ref[...] = _dot(_bf(xn), _bf(w_ref[...])) + wb_ref[...]


def _afno_spectral_kernel(xr_ref, xi_ref, w1t_ref, w1b_ref, b1_ref,
                          w2pr_ref, w2pi_ref, w2i_ref, b2r_ref, b2i_ref,
                          or_ref, oi_ref):
    # First complex layer packed into two lane-dense (C -> 2C) matmuls:
    #   [o1r|o1i] = relu(xr @ [w1r|w1i] + xi @ [-w1i|w1r] + [b1r|b1i])
    xr = _bf(xr_ref[...])
    xi = _bf(xi_ref[...])
    o1 = jnp.maximum(_dot(xr, w1t_ref[...]) + _dot(xi, w1b_ref[...]) + b1_ref[...],
                     0.0)
    o1b = _bf(o1)
    # Second layer: o2r = o1r@w2r - o1i@w2i + b2r  (packed weight [w2r; -w2i]).
    # o2i intentionally reuses the *updated* o2r, matching the PyTorch reference
    # (x_real is overwritten before x_imag is computed).
    o2r = _dot(o1b, w2pr_ref[...]) + b2r_ref[...]
    o2i = _dot(_bf(o2r), w2i_ref[...]) + _dot(o1b, w2pi_ref[...]) + b2i_ref[...]
    or_ref[...] = o2r
    oi_ref[...] = o2i


def _block_tail_kernel(xo_ref, xn_ref, res_ref, bw_ref, bb_ref,
                       g2_ref, beta2_ref, w1_ref, b1_ref, pool_ref, o_ref):
    # AFNO bias path: Conv1d(E, E, 1) == pointwise linear over LayerNorm1(x)
    bias = _dot(_bf(xn_ref[...]), _bf(bw_ref[...])) + bb_ref[...]
    x = xo_ref[...] + bias + res_ref[...]            # irfft out + bias + residual (double_skip)
    xn2 = _ln(x, g2_ref[...], beta2_ref[...])        # LayerNorm2
    h = _dot(_bf(xn2), _bf(w1_ref[...])) + b1_ref[...]
    h = 0.5 * h * (1.0 + lax.erf(h * (1.0 / math.sqrt(2.0))))   # exact GELU
    y = _dot(_bf(h), _bf(pool_ref[...]))             # AdaptiveAvgPool1d as matmul
    o_ref[...] = y + x                               # second residual


# ------------------------------ kernel wrappers ------------------------------

def linear(x, w, b):
    M, K = x.shape
    N = w.shape[1]
    tile, Mp = _row_plan(M)
    out = pl.pallas_call(
        _linear_kernel,
        grid=(Mp // tile,),
        in_specs=[_row_spec(tile, K), _rep_spec(w.shape), _rep_spec(b.shape)],
        out_specs=_row_spec(tile, N),
        out_shape=jax.ShapeDtypeStruct((Mp, N), jnp.float32),
        compiler_params=_CP,
    )(_pad_rows(x, Mp), w, b)
    return out if Mp == M else out[:M]


def layernorm(x, g, b):
    M, C = x.shape
    tile, Mp = _row_plan(M)
    out = pl.pallas_call(
        _layernorm_kernel,
        grid=(Mp // tile,),
        in_specs=[_row_spec(tile, C), _rep_spec(g.shape), _rep_spec(b.shape)],
        out_specs=_row_spec(tile, C),
        out_shape=jax.ShapeDtypeStruct((Mp, C), jnp.float32),
        compiler_params=_CP,
    )(_pad_rows(x, Mp), g, b)
    return out if Mp == M else out[:M]


def ln_linear(x, g, b, w, wb):
    M, C = x.shape
    N = w.shape[1]
    tile, Mp = _row_plan(M)
    out = pl.pallas_call(
        _ln_linear_kernel,
        grid=(Mp // tile,),
        in_specs=[_row_spec(tile, C), _rep_spec(g.shape), _rep_spec(b.shape),
                  _rep_spec(w.shape), _rep_spec(wb.shape)],
        out_specs=_row_spec(tile, N),
        out_shape=jax.ShapeDtypeStruct((Mp, N), jnp.float32),
        compiler_params=_CP,
    )(_pad_rows(x, Mp), g, b, w, wb)
    return out if Mp == M else out[:M]


def afno_spectral(xr, xi, bp):
    M, C = xr.shape
    tile, Mp = _row_plan(M)
    consts = (bp['w1t'], bp['w1b'], bp['b1p'], bp['w2pr'], bp['w2pi'],
              bp['w2i'], bp['b2r'], bp['b2i'])
    or_, oi_ = pl.pallas_call(
        _afno_spectral_kernel,
        grid=(Mp // tile,),
        in_specs=[_row_spec(tile, C), _row_spec(tile, C)]
                 + [_rep_spec(c.shape) for c in consts],
        out_specs=(_row_spec(tile, C), _row_spec(tile, C)),
        out_shape=(jax.ShapeDtypeStruct((Mp, C), jnp.float32),
                   jax.ShapeDtypeStruct((Mp, C), jnp.float32)),
        compiler_params=_CP,
    )(_pad_rows(xr, Mp), _pad_rows(xi, Mp), *consts)
    if Mp != M:
        or_, oi_ = or_[:M], oi_[:M]
    return or_, oi_


def block_tail(xo, xn, res, bp):
    M, E = xo.shape
    tile, Mp = _row_plan(M)
    consts = (bp['bias_w'], bp['bias_b'], bp['n2_g'], bp['n2_b'],
              bp['fc1_w'], bp['fc1_b'], bp['pool'])
    out = pl.pallas_call(
        _block_tail_kernel,
        grid=(Mp // tile,),
        in_specs=[_row_spec(tile, E)] * 3 + [_rep_spec(c.shape) for c in consts],
        out_specs=_row_spec(tile, E),
        out_shape=jax.ShapeDtypeStruct((Mp, E), jnp.float32),
        compiler_params=_CP,
    )(_pad_rows(xo, Mp), _pad_rows(xn, Mp), _pad_rows(res, Mp), *consts)
    return out if Mp == M else out[:M]


# ----------------------------- parameter init -----------------------------

def make_block_diag(blocks):
    # (num_blocks, bs, bs) -> dense block-diagonal (C, C).
    # TODO(synk): for large embed_dim keep the (nb, bs, bs) batched form and
    # grid over blocks instead (dense wastes nb x MXU FLOPs / weight bytes);
    # dense is fine at this toy embed_dim.
    nb, bs, _ = blocks.shape
    eye = jnp.eye(nb, dtype=blocks.dtype)
    return jnp.einsum('nm,nij->nimj', eye, blocks).reshape(nb * bs, nb * bs)


def init_params(key, *, img_size, patch_size, in_chans, out_chans, embed_dim,
                depth, mlp_ratio, fno_blocks):
    h = img_size[0] // patch_size
    w = img_size[1] // patch_size
    N = h * w
    E = embed_dim
    H = int(E * mlp_ratio)
    assert H % E == 0          # AdaptiveAvgPool1d reduces to exact group-average
    assert E % fno_blocks == 0
    bs = E // fno_blocks
    r = H // E

    keys = jax.random.split(key, 4 + depth)
    params = {}
    params['patch_w'] = _bf(0.02 * jax.random.normal(
        keys[0], (in_chans * patch_size * patch_size, E), jnp.float32))
    params['patch_b'] = jnp.zeros((1, E), jnp.float32)
    params['pos_embed'] = 0.02 * jax.random.normal(keys[1], (1, N, E), jnp.float32)

    # AdaptiveAvgPool1d(E) on length H == group average with window r = H/E.
    pool = jnp.repeat(jnp.eye(E, dtype=jnp.float32), r, axis=0) / r      # (H, E)

    blocks = []
    for d in range(depth):
        bk = jax.random.split(keys[4 + d], 8)
        w1 = 0.02 * jax.random.normal(bk[0], (2, fno_blocks, bs, bs), jnp.float32)
        b1 = 0.02 * jax.random.normal(bk[1], (2, fno_blocks, bs), jnp.float32)
        w2 = 0.02 * jax.random.normal(bk[2], (2, fno_blocks, bs, bs), jnp.float32)
        b2 = 0.02 * jax.random.normal(bk[3], (2, fno_blocks, bs), jnp.float32)
        w1r, w1i = make_block_diag(w1[0]), make_block_diag(w1[1])
        w2r, w2i = make_block_diag(w2[0]), make_block_diag(w2[1])
        blk = dict(
            n1_g=jnp.ones((1, E), jnp.float32), n1_b=jnp.zeros((1, E), jnp.float32),
            n2_g=jnp.ones((1, E), jnp.float32), n2_b=jnp.zeros((1, E), jnp.float32),
            # Conv1d(E, E, 1) == pointwise linear; stored transposed (in, out)
            bias_w=_bf(0.02 * jax.random.normal(bk[4], (E, E), jnp.float32)),
            bias_b=0.02 * jax.random.normal(bk[5], (1, E), jnp.float32),
            # packed spectral weights (see _afno_spectral_kernel)
            w1t=_bf(jnp.concatenate([w1r, w1i], axis=1)),                   # (E, 2E)
            w1b=_bf(jnp.concatenate([-w1i, w1r], axis=1)),                  # (E, 2E)
            b1p=jnp.concatenate([b1[0].reshape(1, E), b1[1].reshape(1, E)], axis=1),
            w2pr=_bf(jnp.concatenate([w2r, -w2i], axis=0)),                 # (2E, E)
            w2pi=_bf(jnp.concatenate([jnp.zeros_like(w2r), w2r], axis=0)),  # (2E, E)
            w2i=_bf(w2i),
            b2r=b2[0].reshape(1, E), b2i=b2[1].reshape(1, E),
            fc1_w=_bf(0.02 * jax.random.normal(bk[6], (E, H), jnp.float32)),
            fc1_b=jnp.zeros((1, H), jnp.float32),
            pool=_bf(pool),
        )
        blocks.append(blk)
    params['blocks'] = blocks

    params['norm_g'] = jnp.ones((1, E), jnp.float32)
    params['norm_b'] = jnp.zeros((1, E), jnp.float32)
    params['head_w'] = _bf(0.02 * jax.random.normal(keys[2], (E, out_chans), jnp.float32))
    params['head_b'] = jnp.zeros((1, out_chans), jnp.float32)
    return params


# ------------------------------ forward pass ------------------------------

def afno_block(bp, tok, B, N, E, h, w):
    M = B * N
    xn = layernorm(tok, bp['n1_g'], bp['n1_b'])                     # LN1 (feeds FFT + bias conv)
    # TODO(synk): rfft2/irfft2 stay in jnp.fft — no Pallas FFT primitive on TPU.
    xf = jnp.fft.rfft2(xn.reshape(B, h, w, E), axes=(1, 2), norm='ortho')
    wf = xf.shape[2]
    Ms = B * h * wf
    or_, oi_ = afno_spectral(jnp.real(xf).reshape(Ms, E),
                             jnp.imag(xf).reshape(Ms, E), bp)
    xc = lax.complex(or_, oi_).reshape(B, h, wf, E)
    xo = jnp.fft.irfft2(xc, s=(h, w), axes=(1, 2), norm='ortho').reshape(M, E)
    # Fused: Conv1d bias (from xn) + residual adds + LayerNorm2 + MLP + residual
    return block_tail(xo, xn, tok, bp)


def afnonet_forward(params, x, *, patch_size, embed_dim, out_chans):
    B, C_in, Himg, Wimg = x.shape
    p = patch_size
    h, w = Himg // p, Wimg // p
    N = h * w
    E = embed_dim
    M = B * N

    # PatchEmbed: Conv2d(kernel=stride=p) as patch-extract + matmul
    xp = x.reshape(B, C_in, h, p, w, p).transpose(0, 2, 4, 1, 3, 5)
    tok = linear(xp.reshape(M, C_in * p * p), params['patch_w'], params['patch_b'])
    tok = (tok.reshape(B, N, E) + params['pos_embed']).reshape(M, E)

    for bp in params['blocks']:
        tok = afno_block(bp, tok, B, N, E, h, w)

    # Final LayerNorm fused with the 1x1 ConvTranspose head (pointwise linear);
    # the (B,N,E)->(B,E,h,w)->(B,h,w,E) transpose round trip is removed.
    out = ln_linear(tok, params['norm_g'], params['norm_b'],
                    params['head_w'], params['head_b'])
    # TODO(synk): head output width (out_chans) < 128 lanes -> masked partial
    # stores; unavoidable at this output channel count.
    return out.reshape(B, h, w, out_chans).transpose(0, 3, 1, 2)    # NCHW


# ---------------------------------- main ----------------------------------

if __name__ == "__main__":
    cfg = dict(img_size=[32, 32], patch_size=8, in_chans=4, out_chans=4,
               embed_dim=32, depth=2, mlp_ratio=4.0, fno_blocks=4)

    key = jax.random.PRNGKey(0)
    pkey, xkey = jax.random.split(key)
    params = init_params(pkey, **cfg)

    x = jax.random.normal(xkey, (2, cfg['in_chans'],
                                 cfg['img_size'][0], cfg['img_size'][1]), jnp.float32)

    fwd = jax.jit(partial(afnonet_forward,
                          patch_size=cfg['patch_size'],
                          embed_dim=cfg['embed_dim'],
                          out_chans=cfg['out_chans']))
    out = fwd(params, x)
    out = jax.block_until_ready(out)
    assert out.shape == (2, cfg['out_chans'],
                         cfg['img_size'][0] // cfg['patch_size'],
                         cfg['img_size'][1] // cfg['patch_size'])
    assert out.dtype == jnp.float32
    print("KERNEL_OK")
</pallas_src>

<mosaic_0001>
module attributes {stable_mosaic.version = 11 : i64} {
  func.func @_linear_kernel(%arg0: i32, %arg1: memref<32x256xf32, #tpu.memory_space<vmem>>, %arg2: memref<256x32xbf16, #tpu.memory_space<vmem>>, %arg3: memref<1x32xf32, #tpu.memory_space<vmem>>, %arg4: memref<32x32xf32, #tpu.memory_space<vmem>>) attributes {dimension_semantics = [#tpu.dimension_semantics<parallel>], iteration_bounds = array<i64: 1>, scalar_prefetch = 0 : i64, scratch_operands = 0 : i64, tpu.core_type = #tpu.core_type<tc>, window_params = [{transform_indices = @transform_0, window_bounds = array<i64: 32, 256>}, {pipeline_mode = #tpu.pipeline_mode<synchronous>, transform_indices = @transform_1, window_bounds = array<i64: 256, 32>}, {pipeline_mode = #tpu.pipeline_mode<synchronous>, transform_indices = @transform_2, window_bounds = array<i64: 1, 32>}, {transform_indices = @transform_3, window_bounds = array<i64: 32, 32>}]} {
    %c0 = arith.constant 0 : index
    %c0_0 = arith.constant 0 : index
    %0 = vector.load %arg1[%c0, %c0_0] : memref<32x256xf32, #tpu.memory_space<vmem>>, vector<32x256xf32>
    %1 = arith.truncf %0 : vector<32x256xf32> to vector<32x256xbf16>
    %c0_1 = arith.constant 0 : index
    %c0_2 = arith.constant 0 : index
    %2 = vector.load %arg2[%c0_1, %c0_2] : memref<256x32xbf16, #tpu.memory_space<vmem>>, vector<256x32xbf16>
    %cst = arith.constant dense<0.000000e+00> : vector<32x32xf32>
    %3 = tpu.matmul %1, %2, %cst {dimension_numbers = #tpu.dot_dimension_numbers<[1], [0], [0], [1], [0, 0, 1, 1], [], []>} : vector<32x256xbf16>, vector<256x32xbf16>, vector<32x32xf32> -> vector<32x32xf32>
    %c0_3 = arith.constant 0 : index
    %c0_4 = arith.constant 0 : index
    %4 = vector.load %arg3[%c0_3, %c0_4] : memref<1x32xf32, #tpu.memory_space<vmem>>, vector<1x32xf32>
    %5 = vector.broadcast %4 : vector<1x32xf32> to vector<32x32xf32>
    %6 = arith.addf %3, %5 : vector<32x32xf32>
    %c0_5 = arith.constant 0 : index
    %c0_6 = arith.constant 0 : index
    %7 = vector.load %arg4[%c0_5, %c0_6] : memref<32x32xf32, #tpu.memory_space<vmem>>, vector<32x32xf32>
    tpu.vector_store %arg4[%c0_5, %c0_6], %6 {strides = array<i32>} : memref<32x32xf32, #tpu.memory_space<vmem>>, vector<32x32xf32>,
    return
  }
  func.func @transform_0(%arg0: i32) -> (i32, i32) {
    %c0_i32 = arith.constant 0 : i32
    %c0_i32_0 = arith.constant 0 : i32
    return %arg0, %c0_i32 : i32, i32
  }
  func.func @transform_1(%arg0: i32) -> (i32, i32) {
    %c0_i32 = arith.constant 0 : i32
    %c0_i32_0 = arith.constant 0 : i32
    %c0_i32_1 = arith.constant 0 : i32
    return %c0_i32, %c0_i32_0 : i32, i32
  }
  func.func @transform_2(%arg0: i32) -> (i32, i32) {
    %c0_i32 = arith.constant 0 : i32
    %c0_i32_0 = arith.constant 0 : i32
    %c0_i32_1 = arith.constant 0 : i32
    return %c0_i32, %c0_i32_0 : i32, i32
  }
  func.func @transform_3(%arg0: i32) -> (i32, i32) {
    %c0_i32 = arith.constant 0 : i32
    %c0_i32_0 = arith.constant 0 : i32
    return %arg0, %c0_i32 : i32, i32
  }
}

module attributes {stable_mosaic.version = 11 : i64} {
  func.func @_layernorm_kernel(%arg0: i32, %arg1: memref<32x32xf32, #tpu.memory_space<vmem>>, %arg2: memref<1x32xf32, #tpu.memory_space<vmem>>, %arg3: memref<1x32xf32, #tpu.memory_space<vmem>>, %arg4: memref<32x32xf32, #tpu.memory_space<vmem>>) attributes {dimension_semantics = [#tpu.dimension_semantics<parallel>], iteration_bounds = array<i64: 1>, scalar_prefetch = 0 : i64, scratch_operands = 0 : i64, tpu.core_type = #tpu.core_type<tc>, window_params = [{transform_indices = @transform_0, window_bounds = array<i64: 32, 32>}, {pipeline_mode = #tpu.pipeline_mode<synchronous>, transform_indices = @transform_1, window_bounds = array<i64: 1, 32>}, {pipeline_mode = #tpu.pipeline_mode<synchronous>, transform_indices = @transform_2, window_bounds = array<i64: 1, 32>}, {transform_indices = @transform_3, window_bounds = array<i64: 32, 32>}]} {
    %c0 = arith.constant 0 : index
    %c0_0 = arith.constant 0 : index
    %0 = vector.load %arg1[%c0, %c0_0] : memref<32x32xf32, #tpu.memory_space<vmem>>, vector<32x32xf32>
    %c0_1 = arith.constant 0 : index
    %c0_2 = arith.constant 0 : index
    %1 = vector.load %arg2[%c0_1, %c0_2] : memref<1x32xf32, #tpu.memory_space<vmem>>, vector<1x32xf32>
    %c0_3 = arith.constant 0 : index
    %c0_4 = arith.constant 0 : index
    %2 = vector.load %arg3[%c0_3, %c0_4] : memref<1x32xf32, #tpu.memory_space<vmem>>, vector<1x32xf32>
    %cst = arith.constant dense<0.000000e+00> : vector<32xf32>
    %3 = vector.multi_reduction <add>, %0, %cst [1] : vector<32x32xf32> to vector<32xf32>
    %4 = vector.shape_cast %3 : vector<32xf32> to vector<32x1xf32>
    %cst_5 = arith.constant 3.200000e+01 : f32
    %5 = vector.broadcast %cst_5 : f32 to vector<32x1xf32>
    %6 = arith.divf %4, %5 : vector<32x1xf32>
    %7 = vector.broadcast %6 : vector<32x1xf32> to vector<32x32xf32>
    %8 = arith.subf %0, %7 : vector<32x32xf32>
    %9 = arith.mulf %8, %8 : vector<32x32xf32>
    %cst_6 = arith.constant dense<0.000000e+00> : vector<32xf32>
    %10 = vector.multi_reduction <add>, %9, %cst_6 [1] : vector<32x32xf32> to vector<32xf32>
    %11 = vector.shape_cast %10 : vector<32xf32> to vector<32x1xf32>
    %cst_7 = arith.constant 3.200000e+01 : f32
    %12 = vector.broadcast %cst_7 : f32 to vector<32x1xf32>
    %13 = arith.divf %11, %12 : vector<32x1xf32>
    %cst_8 = arith.constant 9.99999997E-7 : f32
    %14 = vector.broadcast %cst_8 : f32 to vector<32x1xf32>
    %15 = arith.addf %13, %14 : vector<32x1xf32>
    %16 = math.rsqrt %15 : vector<32x1xf32>
    %17 = vector.broadcast %16 : vector<32x1xf32> to vector<32x32xf32>
    %18 = arith.mulf %8, %17 : vector<32x32xf32>
    %19 = vector.broadcast %1 : vector<1x32xf32> to vector<32x32xf32>
    %20 = arith.mulf %18, %19 : vector<32x32xf32>
    %21 = vector.broadcast %2 : vector<1x32xf32> to vector<32x32xf32>
    %22 = arith.addf %20, %21 : vector<32x32xf32>
    %c0_9 = arith.constant 0 : index
    %c0_10 = arith.constant 0 : index
    %23 = vector.load %arg4[%c0_9, %c0_10] : memref<32x32xf32, #tpu.memory_space<vmem>>, vector<32x32xf32>
    tpu.vector_store %arg4[%c0_9, %c0_10], %22 {strides = array<i32>} : memref<32x32xf32, #tpu.memory_space<vmem>>, vector<32x32xf32>,
    return
  }
  func.func @transform_0(%arg0: i32) -> (i32, i32) {
    %c0_i32 = arith.constant 0 : i32
    %c0_i32_0 = arith.constant 0 : i32
    return %arg0, %c0_i32 : i32, i32
  }
  func.func @transform_1(%arg0: i32) -> (i32, i32) {
    %c0_i32 = arith.constant 0 : i32
    %c0_i32_0 = arith.constant 0 : i32
    %c0_i32_1 = arith.constant 0 : i32
    return %c0_i32, %c0_i32_0 : i32, i32
  }
  func.func @transform_2(%arg0: i32) -> (i32, i32) {
    %c0_i32 = arith.constant 0 : i32
    %c0_i32_0 = arith.constant 0 : i32
    %c0_i32_1 = arith.constant 0 : i32
    return %c0_i32, %c0_i32_0 : i32, i32
  }
  func.func @transform_3(%arg0: i32) -> (i32, i32) {
    %c0_i32 = arith.constant 0 : i32
    %c0_i32_0 = arith.constant 0 : i32
    return %arg0, %c0_i32 : i32, i32
  }
}

module attributes {stable_mosaic.version = 11 : i64} {
  func.func @_afno_spectral_kernel(%arg0: i32, %arg1: memref<24x32xf32, #tpu.memory_space<vmem>>, %arg2: memref<24x32xf32, #tpu.memory_space<vmem>>, %arg3: memref<32x64xbf16, #tpu.memory_space<vmem>>, %arg4: memref<32x64xbf16, #tpu.memory_space<vmem>>, %arg5: memref<1x64xf32, #tpu.memory_space<vmem>>, %arg6: memref<64x32xbf16, #tpu.memory_space<vmem>>, %arg7: memref<64x32xbf16, #tpu.memory_space<vmem>>, %arg8: memref<32x32xbf16, #tpu.memory_space<vmem>>, %arg9: memref<1x32xf32, #tpu.memory_space<vmem>>, %arg10: memref<1x32xf32, #tpu.memory_space<vmem>>, %arg11: memref<24x32xf32, #tpu.memory_space<vmem>>, %arg12: memref<24x32xf32, #tpu.memory_space<vmem>>) attributes {dimension_semantics = [#tpu.dimension_semantics<parallel>], iteration_bounds = array<i64: 1>, scalar_prefetch = 0 : i64, scratch_operands = 0 : i64, tpu.core_type = #tpu.core_type<tc>, window_params = [{transform_indices = @transform_0, window_bounds = array<i64: 24, 32>}, {transform_indices = @transform_1, window_bounds = array<i64: 24, 32>}, {pipeline_mode = #tpu.pipeline_mode<synchronous>, transform_indices = @transform_2, window_bounds = array<i64: 32, 64>}, {pipeline_mode = #tpu.pipeline_mode<synchronous>, transform_indices = @transform_3, window_bounds = array<i64: 32, 64>}, {pipeline_mode = #tpu.pipeline_mode<synchronous>, transform_indices = @transform_4, window_bounds = array<i64: 1, 64>}, {pipeline_mode = #tpu.pipeline_mode<synchronous>, transform_indices = @transform_5, window_bounds = array<i64: 64, 32>}, {pipeline_mode = #tpu.pipeline_mode<synchronous>, transform_indices = @transform_6, window_bounds = array<i64: 64, 32>}, {pipeline_mode = #tpu.pipeline_mode<synchronous>, transform_indices = @transform_7, window_bounds = array<i64: 32, 32>}, {pipeline_mode = #tpu.pipeline_mode<synchronous>, transform_indices = @transform_8, window_bounds = array<i64: 1, 32>}, {pipeline_mode = #tpu.pipeline_mode<synchronous>, transform_indices = @transform_9, window_bounds = array<i64: 1, 32>}, {transform_indices = @transform_10, window_bounds = array<i64: 24, 32>}, {transform_indices = @transform_11, window_bounds = array<i64: 24, 32>}]} {
    %c0 = arith.constant 0 : index
    %c0_0 = arith.constant 0 : index
    %0 = vector.load %arg1[%c0, %c0_0] : memref<24x32xf32, #tpu.memory_space<vmem>>, vector<24x32xf32>
    %1 = arith.truncf %0 : vector<24x32xf32> to vector<24x32xbf16>
    %c0_1 = arith.constant 0 : index
    %c0_2 = arith.constant 0 : index
    %2 = vector.load %arg2[%c0_1, %c0_2] : memref<24x32xf32, #tpu.memory_space<vmem>>, vector<24x32xf32>
    %3 = arith.truncf %2 : vector<24x32xf32> to vector<24x32xbf16>
    %c0_3 = arith.constant 0 : index
    %c0_4 = arith.constant 0 : index
    %4 = vector.load %arg3[%c0_3, %c0_4] : memref<32x64xbf16, #tpu.memory_space<vmem>>, vector<32x64xbf16>
    %cst = arith.constant dense<0.000000e+00> : vector<24x64xf32>
    %5 = tpu.matmul %1, %4, %cst {dimension_numbers = #tpu.dot_dimension_numbers<[1], [0], [0], [1], [0, 0, 1, 1], [], []>} : vector<24x32xbf16>, vector<32x64xbf16>, vector<24x64xf32> -> vector<24x64xf32>
    %c0_5 = arith.constant 0 : index
    %c0_6 = arith.constant 0 : index
    %6 = vector.load %arg4[%c0_5, %c0_6] : memref<32x64xbf16, #tpu.memory_space<vmem>>, vector<32x64xbf16>
    %cst_7 = arith.constant dense<0.000000e+00> : vector<24x64xf32>
    %7 = tpu.matmul %3, %6, %cst_7 {dimension_numbers = #tpu.dot_dimension_numbers<[1], [0], [0], [1], [0, 0, 1, 1], [], []>} : vector<24x32xbf16>, vector<32x64xbf16>, vector<24x64xf32> -> vector<24x64xf32>
    %8 = arith.addf %5, %7 : vector<24x64xf32>
    %c0_8 = arith.constant 0 : index
    %c0_9 = arith.constant 0 : index
    %9 = vector.load %arg5[%c0_8, %c0_9] : memref<1x64xf32, #tpu.memory_space<vmem>>, vector<1x64xf32>
    %10 = vector.broadcast %9 : vector<1x64xf32> to vector<24x64xf32>
    %11 = arith.addf %8, %10 : vector<24x64xf32>
    %cst_10 = arith.constant 0.000000e+00 : f32
    %12 = vector.broadcast %cst_10 : f32 to vector<24x64xf32>
    %13 = arith.maximumf %11, %12 : vector<24x64xf32>
    %14 = arith.truncf %13 : vector<24x64xf32> to vector<24x64xbf16>
    %c0_11 = arith.constant 0 : index
    %c0_12 = arith.constant 0 : index
    %15 = vector.load %arg6[%c0_11, %c0_12] : memref<64x32xbf16, #tpu.memory_space<vmem>>, vector<64x32xbf16>
    %cst_13 = arith.constant dense<0.000000e+00> : vector<24x32xf32>
    %16 = tpu.matmul %14, %15, %cst_13 {dimension_numbers = #tpu.dot_dimension_numbers<[1], [0], [0], [1], [0, 0, 1, 1], [], []>} : vector<24x64xbf16>, vector<64x32xbf16>, vector<24x32xf32> -> vector<24x32xf32>
    %c0_14 = arith.constant 0 : index
    %c0_15 = arith.constant 0 : index
    %17 = vector.load %arg9[%c0_14, %c0_15] : memref<1x32xf32, #tpu.memory_space<vmem>>, vector<1x32xf32>
    %18 = vector.broadcast %17 : vector<1x32xf32> to vector<24x32xf32>
    %19 = arith.addf %16, %18 : vector<24x32xf32>
    %20 = arith.truncf %19 : vector<24x32xf32> to vector<24x32xbf16>
    %c0_16 = arith.constant 0 : index
    %c0_17 = arith.constant 0 : index
    %21 = vector.load %arg8[%c0_16, %c0_17] : memref<32x32xbf16, #tpu.memory_space<vmem>>, vector<32x32xbf16>
    %cst_18 = arith.constant dense<0.000000e+00> : vector<24x32xf32>
    %22 = tpu.matmul %20, %21, %cst_18 {dimension_numbers = #tpu.dot_dimension_numbers<[1], [0], [0], [1], [0, 0, 1, 1], [], []>} : vector<24x32xbf16>, vector<32x32xbf16>, vector<24x32xf32> -> vector<24x32xf32>
    %c0_19 = arith.constant 0 : index
    %c0_20 = arith.constant 0 : index
    %23 = vector.load %arg7[%c0_19, %c0_20] : memref<64x32xbf16, #tpu.memory_space<vmem>>, vector<64x32xbf16>
    %cst_21 = arith.constant dense<0.000000e+00> : vector<24x32xf32>
    %24 = tpu.matmul %14, %23, %cst_21 {dimension_numbers = #tpu.dot_dimension_numbers<[1], [0], [0], [1], [0, 0, 1, 1], [], []>} : vector<24x64xbf16>, vector<64x32xbf16>, vector<24x32xf32> -> vector<24x32xf32>
    %25 = arith.addf %22, %24 : vector<24x32xf32>
    %c0_22 = arith.constant 0 : index
    %c0_23 = arith.constant 0 : index
    %26 = vector.load %arg10[%c0_22, %c0_23] : memref<1x32xf32, #tpu.memory_space<vmem>>, vector<1x32xf32>
    %27 = vector.broadcast %26 : vector<1x32xf32> to vector<24x32xf32>
    %28 = arith.addf %25, %27 : vector<24x32xf32>
    %c0_24 = arith.constant 0 : index
    %c0_25 = arith.constant 0 : index
    %29 = vector.load %arg11[%c0_24, %c0_25] : memref<24x32xf32, #tpu.memory_space<vmem>>, vector<24x32xf32>
    tpu.vector_store %arg11[%c0_24, %c0_25], %19 {strides = array<i32>} : memref<24x32xf32, #tpu.memory_space<vmem>>, vector<24x32xf32>,
    %c0_26 = arith.constant 0 : index
    %c0_27 = arith.constant 0 : index
    %30 = vector.load %arg12[%c0_26, %c0_27] : memref<24x32xf32, #tpu.memory_space<vmem>>, vector<24x32xf32>
    tpu.vector_store %arg12[%c0_26, %c0_27], %28 {strides = array<i32>} : memref<24x32xf32, #tpu.memory_space<vmem>>, vector<24x32xf32>,
    return
  }
  func.func @transform_0(%arg0: i32) -> (i32, i32) {
    %c0_i32 = arith.constant 0 : i32
    %c0_i32_0 = arith.constant 0 : i32
    return %arg0, %c0_i32 : i32, i32
  }
  func.func @transform_1(%arg0: i32) -> (i32, i32) {
    %c0_i32 = arith.constant 0 : i32
    %c0_i32_0 = arith.constant 0 : i32
    return %arg0, %c0_i32 : i32, i32
  }
  func.func @transform_2(%arg0: i32) -> (i32, i32) {
    %c0_i32 = arith.constant 0 : i32
    %c0_i32_0 = arith.constant 0 : i32
    %c0_i32_1 = arith.constant 0 : i32
    return %c0_i32, %c0_i32_0 : i32, i32
  }
  func.func @transform_3(%arg0: i32) -> (i32, i32) {
    %c0_i32 = arith.constant 0 : i32
    %c0_i32_0 = arith.constant 0 : i32
    %c0_i32_1 = arith.constant 0 : i32
    return %c0_i32, %c0_i32_0 : i32, i32
  }
  func.func @transform_4(%arg0: i32) -> (i32, i32) {
    %c0_i32 = arith.constant 0 : i32
    %c0_i32_0 = arith.constant 0 : i32
    %c0_i32_1 = arith.constant 0 : i32
    return %c0_i32, %c0_i32_0 : i32, i32
  }
  func.func @transform_5(%arg0: i32) -> (i32, i32) {
    %c0_i32 = arith.constant 0 : i32
    %c0_i32_0 = arith.constant 0 : i32
    %c0_i32_1 = arith.constant 0 : i32
    return %c0_i32, %c0_i32_0 : i32, i32
  }
  func.func @transform_6(%arg0: i32) -> (i32, i32) {
    %c0_i32 = arith.constant 0 : i32
    %c0_i32_0 = arith.constant 0 : i32
    %c0_i32_1 = arith.constant 0 : i32
    return %c0_i32, %c0_i32_0 : i32, i32
  }
  func.func @transform_7(%arg0: i32) -> (i32, i32) {
    %c0_i32 = arith.constant 0 : i32
    %c0_i32_0 = arith.constant 0 : i32
    %c0_i32_1 = arith.constant 0 : i32
    return %c0_i32, %c0_i32_0 : i32, i32
  }
  func.func @transform_8(%arg0: i32) -> (i32, i32) {
    %c0_i32 = arith.constant 0 : i32
    %c0_i32_0 = arith.constant 0 : i32
    %c0_i32_1 = arith.constant 0 : i32
    return %c0_i32, %c0_i32_0 : i32, i32
  }
  func.func @transform_9(%arg0: i32) -> (i32, i32) {
    %c0_i32 = arith.constant 0 : i32
    %c0_i32_0 = arith.constant 0 : i32
    %c0_i32_1 = arith.constant 0 : i32
    return %c0_i32, %c0_i32_0 : i32, i32
  }
  func.func @transform_10(%arg0: i32) -> (i32, i32) {
    %c0_i32 = arith.constant 0 : i32
    %c0_i32_0 = arith.constant 0 : i32
    return %arg0, %c0_i32 : i32, i32
  }
  func.func @transform_11(%arg0: i32) -> (i32, i32) {
    %c0_i32 = arith.constant 0 : i32
    %c0_i32_0 = arith.constant 0 : i32
    return %arg0, %c0_i32 : i32, i32
  }
}

module attributes {stable_mosaic.version = 11 : i64} {
  func.func @_block_tail_kernel(%arg0: i32, %arg1: memref<32x32xf32, #tpu.memory_space<vmem>>, %arg2: memref<32x32xf32, #tpu.memory_space<vmem>>, %arg3: memref<32x32xf32, #tpu.memory_space<vmem>>, %arg4: memref<32x32xbf16, #tpu.memory_space<vmem>>, %arg5: memref<1x32xf32, #tpu.memory_space<vmem>>, %arg6: memref<1x32xf32, #tpu.memory_space<vmem>>, %arg7: memref<1x32xf32, #tpu.memory_space<vmem>>, %arg8: memref<32x128xbf16, #tpu.memory_space<vmem>>, %arg9: memref<1x128xf32, #tpu.memory_space<vmem>>, %arg10: memref<128x32xbf16, #tpu.memory_space<vmem>>, %arg11: memref<32x32xf32, #tpu.memory_space<vmem>>) attributes {dimension_semantics = [#tpu.dimension_semantics<parallel>], iteration_bounds = array<i64: 1>, scalar_prefetch = 0 : i64, scratch_operands = 0 : i64, tpu.core_type = #tpu.core_type<tc>, window_params = [{transform_indices = @transform_0, window_bounds = array<i64: 32, 32>}, {transform_indices = @transform_1, window_bounds = array<i64: 32, 32>}, {transform_indices = @transform_2, window_bounds = array<i64: 32, 32>}, {pipeline_mode = #tpu.pipeline_mode<synchronous>, transform_indices = @transform_3, window_bounds = array<i64: 32, 32>}, {pipeline_mode = #tpu.pipeline_mode<synchronous>, transform_indices = @transform_4, window_bounds = array<i64: 1, 32>}, {pipeline_mode = #tpu.pipeline_mode<synchronous>, transform_indices = @transform_5, window_bounds = array<i64: 1, 32>}, {pipeline_mode = #tpu.pipeline_mode<synchronous>, transform_indices = @transform_6, window_bounds = array<i64: 1, 32>}, {pipeline_mode = #tpu.pipeline_mode<synchronous>, transform_indices = @transform_7, window_bounds = array<i64: 32, 128>}, {pipeline_mode = #tpu.pipeline_mode<synchronous>, transform_indices = @transform_8, window_bounds = array<i64: 1, 128>}, {pipeline_mode = #tpu.pipeline_mode<synchronous>, transform_indices = @transform_9, window_bounds = array<i64: 128, 32>}, {transform_indices = @transform_10, window_bounds = array<i64: 32, 32>}]} {
    %c0 = arith.constant 0 : index
    %c0_0 = arith.constant 0 : index
    %0 = vector.load %arg2[%c0, %c0_0] : memref<32x32xf32, #tpu.memory_space<vmem>>, vector<32x32xf32>
    %1 = arith.truncf %0 : vector<32x32xf32> to vector<32x32xbf16>
    %c0_1 = arith.constant 0 : index
    %c0_2 = arith.constant 0 : index
    %2 = vector.load %arg4[%c0_1, %c0_2] : memref<32x32xbf16, #tpu.memory_space<vmem>>, vector<32x32xbf16>
    %cst = arith.constant dense<0.000000e+00> : vector<32x32xf32>
    %3 = tpu.matmul %1, %2, %cst {dimension_numbers = #tpu.dot_dimension_numbers<[1], [0], [0], [1], [0, 0, 1, 1], [], []>} : vector<32x32xbf16>, vector<32x32xbf16>, vector<32x32xf32> -> vector<32x32xf32>
    %c0_3 = arith.constant 0 : index
    %c0_4 = arith.constant 0 : index
    %4 = vector.load %arg5[%c0_3, %c0_4] : memref<1x32xf32, #tpu.memory_space<vmem>>, vector<1x32xf32>
    %5 = vector.broadcast %4 : vector<1x32xf32> to vector<32x32xf32>
    %6 = arith.addf %3, %5 : vector<32x32xf32>
    %c0_5 = arith.constant 0 : index
    %c0_6 = arith.constant 0 : index
    %7 = vector.load %arg1[%c0_5, %c0_6] : memref<32x32xf32, #tpu.memory_space<vmem>>, vector<32x32xf32>
    %8 = arith.addf %7, %6 : vector<32x32xf32>
    %c0_7 = arith.constant 0 : index
    %c0_8 = arith.constant 0 : index
    %9 = vector.load %arg3[%c0_7, %c0_8] : memref<32x32xf32, #tpu.memory_space<vmem>>, vector<32x32xf32>
    %10 = arith.addf %8, %9 : vector<32x32xf32>
    %c0_9 = arith.constant 0 : index
    %c0_10 = arith.constant 0 : index
    %11 = vector.load %arg6[%c0_9, %c0_10] : memref<1x32xf32, #tpu.memory_space<vmem>>, vector<1x32xf32>
    %c0_11 = arith.constant 0 : index
    %c0_12 = arith.constant 0 : index
    %12 = vector.load %arg7[%c0_11, %c0_12] : memref<1x32xf32, #tpu.memory_space<vmem>>, vector<1x32xf32>
    %cst_13 = arith.constant dense<0.000000e+00> : vector<32xf32>
    %13 = vector.multi_reduction <add>, %10, %cst_13 [1] : vector<32x32xf32> to vector<32xf32>
    %14 = vector.shape_cast %13 : vector<32xf32> to vector<32x1xf32>
    %cst_14 = arith.constant 3.200000e+01 : f32
    %15 = vector.broadcast %cst_14 : f32 to vector<32x1xf32>
    %16 = arith.divf %14, %15 : vector<32x1xf32>
    %17 = vector.broadcast %16 : vector<32x1xf32> to vector<32x32xf32>
    %18 = arith.subf %10, %17 : vector<32x32xf32>
    %19 = arith.mulf %18, %18 : vector<32x32xf32>
    %cst_15 = arith.constant dense<0.000000e+00> : vector<32xf32>
    %20 = vector.multi_reduction <add>, %19, %cst_15 [1] : vector<32x32xf32> to vector<32xf32>
    %21 = vector.shape_cast %20 : vector<32xf32> to vector<32x1xf32>
    %cst_16 = arith.constant 3.200000e+01 : f32
    %22 = vector.broadcast %cst_16 : f32 to vector<32x1xf32>
    %23 = arith.divf %21, %22 : vector<32x1xf32>
    %cst_17 = arith.constant 9.99999997E-7 : f32
    %24 = vector.broadcast %cst_17 : f32 to vector<32x1xf32>
    %25 = arith.addf %23, %24 : vector<32x1xf32>
    %26 = math.rsqrt %25 : vector<32x1xf32>
    %27 = vector.broadcast %26 : vector<32x1xf32> to vector<32x32xf32>
    %28 = arith.mulf %18, %27 : vector<32x32xf32>
    %29 = vector.broadcast %11 : vector<1x32xf32> to vector<32x32xf32>
    %30 = arith.mulf %28, %29 : vector<32x32xf32>
    %31 = vector.broadcast %12 : vector<1x32xf32> to vector<32x32xf32>
    %32 = arith.addf %30, %31 : vector<32x32xf32>
    %33 = arith.truncf %32 : vector<32x32xf32> to vector<32x32xbf16>
    %c0_18 = arith.constant 0 : index
    %c0_19 = arith.constant 0 : index
    %34 = vector.load %arg8[%c0_18, %c0_19] : memref<32x128xbf16, #tpu.memory_space<vmem>>, vector<32x128xbf16>
    %cst_20 = arith.constant dense<0.000000e+00> : vector<32x128xf32>
    %35 = tpu.matmul %33, %34, %cst_20 {dimension_numbers = #tpu.dot_dimension_numbers<[1], [0], [0], [1], [0, 0, 1, 1], [], []>} : vector<32x32xbf16>, vector<32x128xbf16>, vector<32x128xf32> -> vector<32x128xf32>
    %c0_21 = arith.constant 0 : index
    %c0_22 = arith.constant 0 : index
    %36 = vector.load %arg9[%c0_21, %c0_22] : memref<1x128xf32, #tpu.memory_space<vmem>>, vector<1x128xf32>
    %37 = vector.broadcast %36 : vector<1x128xf32> to vector<32x128xf32>
    %38 = arith.addf %35, %37 : vector<32x128xf32>
    %cst_23 = arith.constant 5.000000e-01 : f32
    %39 = vector.broadcast %cst_23 : f32 to vector<32x128xf32>
    %40 = arith.mulf %39, %38 : vector<32x128xf32>
    %cst_24 = arith.constant 0.707106769 : f32
    %41 = vector.broadcast %cst_24 : f32 to vector<32x128xf32>
    %42 = arith.mulf %38, %41 : vector<32x128xf32>
    %43 = math.erf %42 : vector<32x128xf32>
    %cst_25 = arith.constant 1.000000e+00 : f32
    %44 = vector.broadcast %cst_25 : f32 to vector<32x128xf32>
    %45 = arith.addf %44, %43 : vector<32x128xf32>
    %46 = arith.mulf %40, %45 : vector<32x128xf32>
    %47 = arith.truncf %46 : vector<32x128xf32> to vector<32x128xbf16>
    %c0_26 = arith.constant 0 : index
    %c0_27 = arith.constant 0 : index
    %48 = vector.load %arg10[%c0_26, %c0_27] : memref<128x32xbf16, #tpu.memory_space<vmem>>, vector<128x32xbf16>
    %cst_28 = arith.constant dense<0.000000e+00> : vector<32x32xf32>
    %49 = tpu.matmul %47, %48, %cst_28 {dimension_numbers = #tpu.dot_dimension_numbers<[1], [0], [0], [1], [0, 0, 1, 1], [], []>} : vector<32x128xbf16>, vector<128x32xbf16>, vector<32x32xf32> -> vector<32x32xf32>
    %50 = arith.addf %49, %10 : vector<32x32xf32>
    %c0_29 = arith.constant 0 : index
    %c0_30 = arith.constant 0 : index
    %51 = vector.load %arg11[%c0_29, %c0_30] : memref<32x32xf32, #tpu.memory_space<vmem>>, vector<32x32xf32>
    tpu.vector_store %arg11[%c0_29, %c0_30], %50 {strides = array<i32>} : memref<32x32xf32, #tpu.memory_space<vmem>>, vector<32x32xf32>,
    return
  }
  func.func @transform_0(%arg0: i32) -> (i32, i32) {
    %c0_i32 = arith.constant 0 : i32
    %c0_i32_0 = arith.constant 0 : i32
    return %arg0, %c0_i32 : i32, i32
  }
  func.func @transform_1(%arg0: i32) -> (i32, i32) {
    %c0_i32 = arith.constant 0 : i32
    %c0_i32_0 = arith.constant 0 : i32
    return %arg0, %c0_i32 : i32, i32
  }
  func.func @transform_2(%arg0: i32) -> (i32, i32) {
    %c0_i32 = arith.constant 0 : i32
    %c0_i32_0 = arith.constant 0 : i32
    return %arg0, %c0_i32 : i32, i32
  }
  func.func @transform_3(%arg0: i32) -> (i32, i32) {
    %c0_i32 = arith.constant 0 : i32
    %c0_i32_0 = arith.constant 0 : i32
    %c0_i32_1 = arith.constant 0 : i32
    return %c0_i32, %c0_i32_0 : i32, i32
  }
  func.func @transform_4(%arg0: i32) -> (i32, i32) {
    %c0_i32 = arith.constant 0 : i32
    %c0_i32_0 = arith.constant 0 : i32
    %c0_i32_1 = arith.constant 0 : i32
    return %c0_i32, %c0_i32_0 : i32, i32
  }
  func.func @transform_5(%arg0: i32) -> (i32, i32) {
    %c0_i32 = arith.constant 0 : i32
    %c0_i32_0 = arith.constant 0 : i32
    %c0_i32_1 = arith.constant 0 : i32
    return %c0_i32, %c0_i32_0 : i32, i32
  }
  func.func @transform_6(%arg0: i32) -> (i32, i32) {
    %c0_i32 = arith.constant 0 : i32
    %c0_i32_0 = arith.constant 0 : i32
    %c0_i32_1 = arith.constant 0 : i32
    return %c0_i32, %c0_i32_0 : i32, i32
  }
  func.func @transform_7(%arg0: i32) -> (i32, i32) {
    %c0_i32 = arith.constant 0 : i32
    %c0_i32_0 = arith.constant 0 : i32
    %c0_i32_1 = arith.constant 0 : i32
    return %c0_i32, %c0_i32_0 : i32, i32
  }
  func.func @transform_8(%arg0: i32) -> (i32, i32) {
    %c0_i32 = arith.constant 0 : i32
    %c0_i32_0 = arith.constant 0 : i32
    %c0_i32_1 = arith.constant 0 : i32
    return %c0_i32, %c0_i32_0 : i32, i32
  }
  func.func @transform_9(%arg0: i32) -> (i32, i32) {
    %c0_i32 = arith.constant 0 : i32
    %c0_i32_0 = arith.constant 0 : i32
    %c0_i32_1 = arith.constant 0 : i32
    return %c0_i32, %c0_i32_0 : i32, i32
  }
  func.func @transform_10(%arg0: i32) -> (i32, i32) {
    %c0_i32 = arith.constant 0 : i32
    %c0_i32_0 = arith.constant 0 : i32
    return %arg0, %c0_i32 : i32, i32
  }
}

module attributes {stable_mosaic.version = 11 : i64} {
  func.func @_ln_linear_kernel(%arg0: i32, %arg1: memref<32x32xf32, #tpu.memory_space<vmem>>, %arg2: memref<1x32xf32, #tpu.memory_space<vmem>>, %arg3: memref<1x32xf32, #tpu.memory_space<vmem>>, %arg4: memref<32x4xbf16, #tpu.memory_space<vmem>>, %arg5: memref<1x4xf32, #tpu.memory_space<vmem>>, %arg6: memref<32x4xf32, #tpu.memory_space<vmem>>) attributes {dimension_semantics = [#tpu.dimension_semantics<parallel>], iteration_bounds = array<i64: 1>, scalar_prefetch = 0 : i64, scratch_operands = 0 : i64, tpu.core_type = #tpu.core_type<tc>, window_params = [{transform_indices = @transform_0, window_bounds = array<i64: 32, 32>}, {pipeline_mode = #tpu.pipeline_mode<synchronous>, transform_indices = @transform_1, window_bounds = array<i64: 1, 32>}, {pipeline_mode = #tpu.pipeline_mode<synchronous>, transform_indices = @transform_2, window_bounds = array<i64: 1, 32>}, {pipeline_mode = #tpu.pipeline_mode<synchronous>, transform_indices = @transform_3, window_bounds = array<i64: 32, 4>}, {pipeline_mode = #tpu.pipeline_mode<synchronous>, transform_indices = @transform_4, window_bounds = array<i64: 1, 4>}, {transform_indices = @transform_5, window_bounds = array<i64: 32, 4>}]} {
    %c0 = arith.constant 0 : index
    %c0_0 = arith.constant 0 : index
    %0 = vector.load %arg1[%c0, %c0_0] : memref<32x32xf32, #tpu.memory_space<vmem>>, vector<32x32xf32>
    %c0_1 = arith.constant 0 : index
    %c0_2 = arith.constant 0 : index
    %1 = vector.load %arg2[%c0_1, %c0_2] : memref<1x32xf32, #tpu.memory_space<vmem>>, vector<1x32xf32>
    %c0_3 = arith.constant 0 : index
    %c0_4 = arith.constant 0 : index
    %2 = vector.load %arg3[%c0_3, %c0_4] : memref<1x32xf32, #tpu.memory_space<vmem>>, vector<1x32xf32>
    %cst = arith.constant dense<0.000000e+00> : vector<32xf32>
    %3 = vector.multi_reduction <add>, %0, %cst [1] : vector<32x32xf32> to vector<32xf32>
    %4 = vector.shape_cast %3 : vector<32xf32> to vector<32x1xf32>
    %cst_5 = arith.constant 3.200000e+01 : f32
    %5 = vector.broadcast %cst_5 : f32 to vector<32x1xf32>
    %6 = arith.divf %4, %5 : vector<32x1xf32>
    %7 = vector.broadcast %6 : vector<32x1xf32> to vector<32x32xf32>
    %8 = arith.subf %0, %7 : vector<32x32xf32>
    %9 = arith.mulf %8, %8 : vector<32x32xf32>
    %cst_6 = arith.constant dense<0.000000e+00> : vector<32xf32>
    %10 = vector.multi_reduction <add>, %9, %cst_6 [1] : vector<32x32xf32> to vector<32xf32>
    %11 = vector.shape_cast %10 : vector<32xf32> to vector<32x1xf32>
    %cst_7 = arith.constant 3.200000e+01 : f32
    %12 = vector.broadcast %cst_7 : f32 to vector<32x1xf32>
    %13 = arith.divf %11, %12 : vector<32x1xf32>
    %cst_8 = arith.constant 9.99999997E-7 : f32
    %14 = vector.broadcast %cst_8 : f32 to vector<32x1xf32>
    %15 = arith.addf %13, %14 : vector<32x1xf32>
    %16 = math.rsqrt %15 : vector<32x1xf32>
    %17 = vector.broadcast %16 : vector<32x1xf32> to vector<32x32xf32>
    %18 = arith.mulf %8, %17 : vector<32x32xf32>
    %19 = vector.broadcast %1 : vector<1x32xf32> to vector<32x32xf32>
    %20 = arith.mulf %18, %19 : vector<32x32xf32>
    %21 = vector.broadcast %2 : vector<1x32xf32> to vector<32x32xf32>
    %22 = arith.addf %20, %21 : vector<32x32xf32>
    %23 = arith.truncf %22 : vector<32x32xf32> to vector<32x32xbf16>
    %c0_9 = arith.constant 0 : index
    %c0_10 = arith.constant 0 : index
    %24 = vector.load %arg4[%c0_9, %c0_10] : memref<32x4xbf16, #tpu.memory_space<vmem>>, vector<32x4xbf16>
    %cst_11 = arith.constant dense<0.000000e+00> : vector<32x4xf32>
    %25 = tpu.matmul %23, %24, %cst_11 {dimension_numbers = #tpu.dot_dimension_numbers<[1], [0], [0], [1], [0, 0, 1, 1], [], []>} : vector<32x32xbf16>, vector<32x4xbf16>, vector<32x4xf32> -> vector<32x4xf32>
    %c0_12 = arith.constant 0 : index
    %c0_13 = arith.constant 0 : index
    %26 = vector.load %arg5[%c0_12, %c0_13] : memref<1x4xf32, #tpu.memory_space<vmem>>, vector<1x4xf32>
    %27 = vector.broadcast %26 : vector<1x4xf32> to vector<32x4xf32>
    %28 = arith.addf %25, %27 : vector<32x4xf32>
    %c0_14 = arith.constant 0 : index
    %c0_15 = arith.constant 0 : index
    %29 = vector.load %arg6[%c0_14, %c0_15] : memref<32x4xf32, #tpu.memory_space<vmem>>, vector<32x4xf32>
    tpu.vector_store %arg6[%c0_14, %c0_15], %28 {strides = array<i32>} : memref<32x4xf32, #tpu.memory_space<vmem>>, vector<32x4xf32>,
    return
  }
  func.func @transform_0(%arg0: i32) -> (i32, i32) {
    %c0_i32 = arith.constant 0 : i32
    %c0_i32_0 = arith.constant 0 : i32
    return %arg0, %c0_i32 : i32, i32
  }
  func.func @transform_1(%arg0: i32) -> (i32, i32) {
    %c0_i32 = arith.constant 0 : i32
    %c0_i32_0 = arith.constant 0 : i32
    %c0_i32_1 = arith.constant 0 : i32
    return %c0_i32, %c0_i32_0 : i32, i32
  }
  func.func @transform_2(%arg0: i32) -> (i32, i32) {
    %c0_i32 = arith.constant 0 : i32
    %c0_i32_0 = arith.constant 0 : i32
    %c0_i32_1 = arith.constant 0 : i32
    return %c0_i32, %c0_i32_0 : i32, i32
  }
  func.func @transform_3(%arg0: i32) -> (i32, i32) {
    %c0_i32 = arith.constant 0 : i32
    %c0_i32_0 = arith.constant 0 : i32
    %c0_i32_1 = arith.constant 0 : i32
    return %c0_i32, %c0_i32_0 : i32, i32
  }
  func.func @transform_4(%arg0: i32) -> (i32, i32) {
    %c0_i32 = arith.constant 0 : i32
    %c0_i32_0 = arith.constant 0 : i32
    %c0_i32_1 = arith.constant 0 : i32
    return %c0_i32, %c0_i32_0 : i32, i32
  }
  func.func @transform_5(%arg0: i32) -> (i32, i32) {
    %c0_i32 = arith.constant 0 : i32
    %c0_i32_0 = arith.constant 0 : i32
    return %arg0, %c0_i32 : i32, i32
  }
}

</mosaic_0001>

<llo_original>
// kernel: afnonet_forward.9
$region0: #{afnonet_forward.9}
  #allocation0 [shape = 'u32[]', space=smem, size = 0x4, offset = 0x4, fixed_abs, tag = 'smem constant byte address 0x4 - core index']
  #allocation1 [shape = 'u32[144,128]{1,0:T(1,128)}', space=vmem, size = 0x12000, scoped, tag = 'internal scratch']
  %s0 = inlined_call_operand.vmem [shape: f32[32,32], index: 0, kind: input, shape index: {}]
  %s1 = inlined_call_operand.vmem [shape: f32[1,32], index: 1, kind: input, shape index: {}]
  %s2 = inlined_call_operand.vmem [shape: f32[1,32], index: 2, kind: input, shape index: {}]
  %s3 = inlined_call_operand.vmem [shape: f32[32,32], index: 3, kind: output, shape index: {}]
  %s4 = sld [smem:[#allocation0]]
  $region22: #{afnonet_forward.9} parent=0
    _
  %s6 = ssub.s32 1, %s4
  %s7 = scalar_select 0, %s6, %s4
  // Predicated region
  $region2: #{afnonet_forward.9} parent=0 // pred_check
    _
  $region3: #{afnonet_forward.9} parent=0 // pred_check_branch
    %9 = sbr.rel (0) target = $region5
  $region4: #{afnonet_forward.9} parent=0 // pred_region
    _
  $region5: #{afnonet_forward.9} parent=0 // pred_fallthru
    _
  // Predicated region
  $region6: #{afnonet_forward.9} parent=0 // pred_check
    _
  $region7: #{afnonet_forward.9} parent=0 // pred_check_branch
    %11 = sbr.rel (0) target = $region9
  $region8: #{afnonet_forward.9} parent=0 // pred_region
    _
  $region9: #{afnonet_forward.9} parent=0 // pred_fallthru
    _
  // Predicated region
  $region10: #{afnonet_forward.9} parent=0 // pred_check
    _
  $region11: #{afnonet_forward.9} parent=0 // pred_check_branch
    %13 = sbr.rel (0) target = $region13
  $region12: #{afnonet_forward.9} parent=0 // pred_region
    _
  $region13: #{afnonet_forward.9} parent=0 // pred_fallthru
    _
  %v14 = vld [vmem:[%s0] sm:$0xff]
  %v15 = vld [vmem:[%s0 + $0x8] sm:$0xff]
  %v16 = vld [vmem:[%s0 + $0x10] sm:$0xff]
  %v17 = vld [vmem:[%s0 + $0x18] sm:$0xff]
  %v18 = vld [vmem:[%s1] sm:$0x1]
  %v19 = vld [vmem:[%s2] sm:$0x1]
  %vm20 = vcmask 261120
  %v21 = vsel %vm20, %v14, 0.0
  %22 = vadd.xlane.f32.xlu0 %v21
  %v23 = vpop.xlane.xlu0 %22
  %v24 = vsel %vm20, %v15, 0.0
  %25 = vadd.xlane.f32.xlu0 %v24
  %v26 = vpop.xlane.xlu0 %25
  %v27 = vsel %vm20, %v16, 0.0
  %28 = vadd.xlane.f32.xlu0 %v27
  %v29 = vpop.xlane.xlu0 %28
  %v30 = vsel %vm20, %v17, 0.0
  %31 = vadd.xlane.f32.xlu0 %v30
  %v32 = vpop.xlane.xlu0 %31
  %v33 = vrcp.pop 32.0
  %v34 = vmul.f32 %v23, %v33
  %v35 = vmul.f32 %v26, %v33
  %v36 = vmul.f32 %v29, %v33
  %v37 = vmul.f32 %v32, %v33
  %v38 = vsub.f32 %v14, %v34
  %v39 = vsub.f32 %v15, %v35
  %v40 = vsub.f32 %v16, %v36
  %v41 = vsub.f32 %v17, %v37
  %v42 = vmul.f32 %v38, %v38
  %v43 = vmul.f32 %v39, %v39
  %v44 = vmul.f32 %v40, %v40
  %v45 = vmul.f32 %v41, %v41
  %v46 = vsel %vm20, %v42, 0.0
  %47 = vadd.xlane.f32.xlu0 %v46
  %v48 = vpop.xlane.xlu0 %47
  %v49 = vsel %vm20, %v43, 0.0
  %50 = vadd.xlane.f32.xlu0 %v49
  %v51 = vpop.xlane.xlu0 %50
  %v52 = vsel %vm20, %v44, 0.0
  %53 = vadd.xlane.f32.xlu0 %v52
  %v54 = vpop.xlane.xlu0 %53
  %v55 = vsel %vm20, %v45, 0.0
  %56 = vadd.xlane.f32.xlu0 %v55
  %v57 = vpop.xlane.xlu0 %56
  %v58 = vmul.f32 %v48, %v33
  %v59 = vmul.f32 %v51, %v33
  %v60 = vmul.f32 %v54, %v33
  %v61 = vmul.f32 %v57, %v33
  %v62 = vadd.f32 %v58, 1e-06
  %v63 = vadd.f32 %v59, 1e-06
  %v64 = vadd.f32 %v60, 1e-06
  %v65 = vadd.f32 %v61, 1e-06
  %v66 = vrsqrt.pop %v62
  %v67 = vrsqrt.pop %v63
  %v68 = vrsqrt.pop %v64
  %v69 = vrsqrt.pop %v65
  %v70 = vmul.f32 %v38, %v66
  %v71 = vmul.f32 %v39, %v67
  %v72 = vmul.f32 %v40, %v68
  %v73 = vmul.f32 %v41, %v69
  %v75 = vlaneseq
  %v76 = vshrl.u32 %v75, 7
  %v77 = vsub.s32 0, %v76
  %v78 = vrot.slane %v18, %v77
  %v80 = vmul.f32 %v70, %v78
  %v81 = vmul.f32 %v71, %v78
  %v82 = vmul.f32 %v72, %v78
  %v83 = vmul.f32 %v73, %v78
  %v85 = vlaneseq
  %v86 = vshrl.u32 %v85, 7
  %v87 = vsub.s32 0, %v86
  %v88 = vrot.slane %v19, %v87
  %v90 = vadd.f32 %v80, %v88
  %v91 = vadd.f32 %v81, %v88
  %v92 = vadd.f32 %v82, %v88
  %v93 = vadd.f32 %v83, %v88
  %94 = vst.msk [vmem:[%s3] sm:$0xff] %vm20, %v90
  %95 = vst.msk [vmem:[%s3 + $0x8] sm:$0xff] %vm20, %v91
  %96 = vst.msk [vmem:[%s3 + $0x10] sm:$0xff] %vm20, %v92
  %97 = vst.msk [vmem:[%s3 + $0x18] sm:$0xff] %vm20, %v93
  // Predicated region
  $region14: #{afnonet_forward.9} parent=0 // pred_check
    _
  $region15: #{afnonet_forward.9} parent=0 // pred_check_branch
    %99 = sbr.rel (0) target = $region17
  $region16: #{afnonet_forward.9} parent=0 // pred_region
    _
  $region17: #{afnonet_forward.9} parent=0 // pred_fallthru
    _
  // Predicated region
  $region18: #{afnonet_forward.9} parent=0 // pred_check
    _
  $region19: #{afnonet_forward.9} parent=0 // pred_check_branch
    %101 = sbr.rel (0) target = $region21
  $region20: #{afnonet_forward.9} parent=0 // pred_region
    _
  $region21: #{afnonet_forward.9} parent=0 // pred_fallthru
    _

// kernel: afnonet_forward.8
$region0: #{afnonet_forward.8}
  #allocation0 [shape = 'u32[]', space=smem, size = 0x4, offset = 0x4, fixed_abs, tag = 'smem constant byte address 0x4 - core index']
  #allocation1 [shape = 'u32[144,128]{1,0:T(1,128)}', space=vmem, size = 0x12000, scoped, tag = 'internal scratch']
  %s0 = inlined_call_operand.vmem [shape: f32[32,256], index: 0, kind: input, shape index: {}]
  %s1 = inlined_call_operand.vmem [shape: bf16[256,32], index: 1, kind: input, shape index: {}]
  %s2 = inlined_call_operand.vmem [shape: f32[1,32], index: 2, kind: input, shape index: {}]
  %s3 = inlined_call_operand.vmem [shape: f32[32,32], index: 3, kind: output, shape index: {}]
  %s4 = sld [smem:[#allocation0]]
  $region22: #{afnonet_forward.8} parent=0
    _
  %s6 = ssub.s32 1, %s4
  %s7 = scalar_select 0, %s6, %s4
  // Predicated region
  $region2: #{afnonet_forward.8} parent=0 // pred_check
    _
  $region3: #{afnonet_forward.8} parent=0 // pred_check_branch
    %9 = sbr.rel (0) target = $region5
  $region4: #{afnonet_forward.8} parent=0 // pred_region
    _
  $region5: #{afnonet_forward.8} parent=0 // pred_fallthru
    _
  // Predicated region
  $region6: #{afnonet_forward.8} parent=0 // pred_check
    _
  $region7: #{afnonet_forward.8} parent=0 // pred_check_branch
    %11 = sbr.rel (0) target = $region9
  $region8: #{afnonet_forward.8} parent=0 // pred_region
    _
  $region9: #{afnonet_forward.8} parent=0 // pred_fallthru
    _
  // Predicated region
  $region10: #{afnonet_forward.8} parent=0 // pred_check
    _
  $region11: #{afnonet_forward.8} parent=0 // pred_check_branch
    %13 = sbr.rel (0) target = $region13
  $region12: #{afnonet_forward.8} parent=0 // pred_region
    _
  $region13: #{afnonet_forward.8} parent=0 // pred_fallthru
    _
  %v15 = vld [vmem:[%s0] sm:$0xff]
  %v16 = vld [vmem:[%s0 + $0x8] sm:$0xff]
  %v17 = vld [vmem:[%s0 + $0x10] sm:$0xff]
  %v18 = vld [vmem:[%s0 + $0x18] sm:$0xff]
  %v19 = vld [vmem:[%s0 + $0x20] sm:$0xff]
  %v20 = vld [vmem:[%s0 + $0x28] sm:$0xff]
  %v21 = vld [vmem:[%s0 + $0x30] sm:$0xff]
  %v22 = vld [vmem:[%s0 + $0x38] sm:$0xff]
  %v23 = vpack.c.bf16 %v17, %v15
  %v24 = vpack.c.bf16 %v18, %v16
  %v25 = vpack.c.bf16 %v21, %v19
  %v26 = vpack.c.bf16 %v22, %v20
  %v27 = vld [vmem:[%s1] sm:$0xf]
  %v28 = vld [vmem:[%s1 + $0x4] sm:$0xf]
  %v29 = vld [vmem:[%s1 + $0x8] sm:$0xf]
  %v30 = vld [vmem:[%s1 + $0xc] sm:$0xf]
  %v31 = vld [vmem:[%s1 + $0x10] sm:$0xf]
  %v32 = vld [vmem:[%s1 + $0x14] sm:$0xf]
  %v33 = vld [vmem:[%s1 + $0x18] sm:$0xf]
  %v34 = vld [vmem:[%s1 + $0x1c] sm:$0xf]
  %v35 = vld [vmem:[%s1 + $0x20] sm:$0xf]
  %v36 = vld [vmem:[%s1 + $0x24] sm:$0xf]
  %v37 = vld [vmem:[%s1 + $0x28] sm:$0xf]
  %v38 = vld [vmem:[%s1 + $0x2c] sm:$0xf]
  %v39 = vld [vmem:[%s1 + $0x30] sm:$0xf]
  %v40 = vld [vmem:[%s1 + $0x34] sm:$0xf]
  %v41 = vld [vmem:[%s1 + $0x38] sm:$0xf]
  %v42 = vld [vmem:[%s1 + $0x3c] sm:$0xf]
  %v43 = vld [vmem:[%s1 + $0x40] sm:$0xf]
  %v44 = vld [vmem:[%s1 + $0x44] sm:$0xf]
  %v45 = vld [vmem:[%s1 + $0x48] sm:$0xf]
  %v46 = vld [vmem:[%s1 + $0x4c] sm:$0xf]
  %v47 = vld [vmem:[%s1 + $0x50] sm:$0xf]
  %v48 = vld [vmem:[%s1 + $0x54] sm:$0xf]
  %v49 = vld [vmem:[%s1 + $0x58] sm:$0xf]
  %v50 = vld [vmem:[%s1 + $0x5c] sm:$0xf]
  %v51 = vld [vmem:[%s1 + $0x60] sm:$0xf]
  %v52 = vld [vmem:[%s1 + $0x64] sm:$0xf]
  %v53 = vld [vmem:[%s1 + $0x68] sm:$0xf]
  %v54 = vld [vmem:[%s1 + $0x6c] sm:$0xf]
  %v55 = vld [vmem:[%s1 + $0x70] sm:$0xf]
  %v56 = vld [vmem:[%s1 + $0x74] sm:$0xf]
  %v57 = vld [vmem:[%s1 + $0x78] sm:$0xf]
  %v58 = vld [vmem:[%s1 + $0x7c] sm:$0xf]
  %v59 = vld [vmem:[%s2] sm:$0x1]
  %v61 = vlaneseq
  %v62 = vshrl.u32 %v61, 7
  %v63 = vsub.s32 0, %v62
  %v64 = vrot.slane %v59, %v63
  %v98 = vunpack.c.l.b16 %v27
  %v99 = vunpack.c.l.b16 %v28
  %v100 = vunpack.c.l.b16 %v29
  %v101 = vunpack.c.l.b16 %v30
  %v102 = vunpack.c.l.b16 %v31
  %v103 = vunpack.c.l.b16 %v32
  %v104 = vunpack.c.l.b16 %v33
  %v105 = vunpack.c.l.b16 %v34
  %v106 = vunpack.c.l.b16 %v35
  %v107 = vunpack.c.l.b16 %v36
  %v108 = vunpack.c.l.b16 %v37
  %v109 = vunpack.c.l.b16 %v38
  %v110 = vunpack.c.l.b16 %v39
  %v111 = vunpack.c.l.b16 %v40
  %v112 = vunpack.c.l.b16 %v41
  %v113 = vunpack.c.l.b16 %v42
  %v114 = vunpack.c.l.b16 %v43
  %v115 = vunpack.c.l.b16 %v44
  %v116 = vunpack.c.l.b16 %v45
  %v117 = vunpack.c.l.b16 %v46
  %v118 = vunpack.c.l.b16 %v47
  %v119 = vunpack.c.l.b16 %v48
  %v120 = vunpack.c.l.b16 %v49
  %v121 = vunpack.c.l.b16 %v50
  %v122 = vunpack.c.l.b16 %v51
  %v123 = vunpack.c.l.b16 %v52
  %v124 = vunpack.c.l.b16 %v53
  %v125 = vunpack.c.l.b16 %v54
  %v126 = vunpack.c.l.b16 %v55
  %v127 = vunpack.c.l.b16 %v56
  %v128 = vunpack.c.l.b16 %v57
  %v129 = vunpack.c.l.b16 %v58
  %v130 = vpack.c.b16 %v99, %v98
  %v131 = vpack.c.b16 %v101, %v100
  %v132 = vpack.c.b16 %v103, %v102
  %v133 = vpack.c.b16 %v105, %v104
  %v134 = vpack.c.b16 %v107, %v106
  %v135 = vpack.c.b16 %v109, %v108
  %v136 = vpack.c.b16 %v111, %v110
  %v137 = vpack.c.b16 %v113, %v112
  %v138 = vpack.c.b16 %v115, %v114
  %v139 = vpack.c.b16 %v117, %v116
  %v140 = vpack.c.b16 %v119, %v118
  %v141 = vpack.c.b16 %v121, %v120
  %v142 = vpack.c.b16 %v123, %v122
  %v143 = vpack.c.b16 %v125, %v124
  %v144 = vpack.c.b16 %v127, %v126
  %v145 = vpack.c.b16 %v129, %v128
  %162 = vmatprep.subr.bf16.mxu0 0
  %163 = vmatpush1.bf16.msra.mxu0 %v130
  %164 = vmatprep.subr.bf16.mxu0 0
  %165 = vmatpush1.bf16.msra.mxu0 %v131
  %166 = vmatprep.subr.bf16.mxu0 0
  %167 = vmatpush1.bf16.msra.mxu0 %v132
  %168 = vmatprep.subr.bf16.mxu0 0
  %169 = vmatpush1.bf16.msra.mxu0 %v133
  %170 = vmatprep.subr.bf16.mxu0 0
  %171 = vmatpush1.bf16.msra.mxu0 %v134
  %172 = vmatprep.subr.bf16.mxu0 0
  %173 = vmatpush1.bf16.msra.mxu0 %v135
  %174 = vmatprep.subr.bf16.mxu0 0
  %175 = vmatpush1.bf16.msra.mxu0 %v136
  %176 = vmatprep.subr.bf16.mxu0 0
  %177 = vmatpush1.bf16.msra.mxu0 %v137
  %178 = vmatprep.subr.bf16.mxu0 0
  %179 = vmatpush1.bf16.msra.mxu0 %v138
  %180 = vmatprep.subr.bf16.mxu0 0
  %181 = vmatpush1.bf16.msra.mxu0 %v139
  %182 = vmatprep.subr.bf16.mxu0 0
  %183 = vmatpush1.bf16.msra.mxu0 %v140
  %184 = vmatprep.subr.bf16.mxu0 0
  %185 = vmatpush1.bf16.msra.mxu0 %v141
  %186 = vmatprep.subr.bf16.mxu0 0
  %187 = vmatpush1.bf16.msra.mxu0 %v142
  %188 = vmatprep.subr.bf16.mxu0 0
  %189 = vmatpush1.bf16.msra.mxu0 %v143
  %190 = vmatprep.subr.bf16.mxu0 0
  %191 = vmatpush1.bf16.msra.mxu0 %v144
  %192 = vmatprep.subr.bf16.mxu0 0
  %193 = vmatpush1.bf16.msra.mxu0 %v145
  %194 = vmatprep.mubr.bf16.mxu0 %v24
  %195 = vmatmul.mubr.bf16.gmra.mrb[0].mxu0 %v23
  %v196 = vpop.f32.mrb[0].mxu0
  %v197 = vadd.f32 %v64, %v196
  %v198 = vpop.f32.mrb[0].mxu0
  %v199 = vpop.f32.mrb[0].mxu0
  %v200 = vadd.f32 %v64, %v199
  %v201 = vpop.f32.mrb[0].mxu0
  %202 = vmatprep.mubr.bf16.mxu0 %v26
  %203 = vmatmul.mubr.bf16.gmra.mrb[0].mxu0 %v25
  %v204 = vpop.f32.mrb[0].mxu0
  %v205 = vadd.f32 %v64, %v204
  %v206 = vpop.f32.mrb[0].mxu0
  %v207 = vpop.f32.mrb[0].mxu0
  %v208 = vadd.f32 %v64, %v207
  %v209 = vpop.f32.mrb[0].mxu0
  %210 = vdwg.mxu0
  %vm211 = vcmask 261120
  %212 = vst.msk [vmem:[%s3] sm:$0xff] %vm211, %v197
  %213 = vst.msk [vmem:[%s3 + $0x8] sm:$0xff] %vm211, %v200
  %214 = vst.msk [vmem:[%s3 + $0x10] sm:$0xff] %vm211, %v205
  %215 = vst.msk [vmem:[%s3 + $0x18] sm:$0xff] %vm211, %v208
  // Predicated region
  $region14: #{afnonet_forward.8} parent=0 // pred_check
    _
  $region15: #{afnonet_forward.8} parent=0 // pred_check_branch
    %217 = sbr.rel (0) target = $region17
  $region16: #{afnonet_forward.8} parent=0 // pred_region
    _
  $region17: #{afnonet_forward.8} parent=0 // pred_fallthru
    _
  // Predicated region
  $region18: #{afnonet_forward.8} parent=0 // pred_check
    _
  $region19: #{afnonet_forward.8} parent=0 // pred_check_branch
    %219 = sbr.rel (0) target = $region21
  $region20: #{afnonet_forward.8} parent=0 // pred_region
    _
  $region21: #{afnonet_forward.8} parent=0 // pred_fallthru
    _

// kernel: afnonet_forward.10
$region0: #{afnonet_forward.10}
  #allocation0 [shape = 'u32[]', space=smem, size = 0x4, offset = 0x4, fixed_abs, tag = 'smem constant byte address 0x4 - core index']
  #allocation1 [shape = 'u32[144,128]{1,0:T(1,128)}', space=vmem, size = 0x12000, scoped, tag = 'internal scratch']
  %s0 = inlined_call_operand.vmem [shape: f32[24,32], index: 0, kind: input, shape index: {}]
  %s1 = inlined_call_operand.vmem [shape: f32[24,32], index: 1, kind: input, shape index: {}]
  %s2 = inlined_call_operand.vmem [shape: bf16[32,64], index: 2, kind: input, shape index: {}]
  %s3 = inlined_call_operand.vmem [shape: bf16[32,64], index: 3, kind: input, shape index: {}]
  %s4 = inlined_call_operand.vmem [shape: f32[1,64], index: 4, kind: input, shape index: {}]
  %s5 = inlined_call_operand.vmem [shape: bf16[64,32], index: 5, kind: input, shape index: {}]
  %s6 = inlined_call_operand.vmem [shape: bf16[64,32], index: 6, kind: input, shape index: {}]
  %s7 = inlined_call_operand.vmem [shape: bf16[32,32], index: 7, kind: input, shape index: {}]
  %s8 = inlined_call_operand.vmem [shape: f32[1,32], index: 8, kind: input, shape index: {}]
  %s9 = inlined_call_operand.vmem [shape: f32[1,32], index: 9, kind: input, shape index: {}]
  %s10 = inlined_call_operand.vmem [shape: f32[24,32], index: 10, kind: output, shape index: {0}]
  %s11 = inlined_call_operand.vmem [shape: f32[24,32], index: 11, kind: output, shape index: {1}]
  %12 = xla_tuple %s10, %s11
  %s13 = sld [smem:[#allocation0]]
  $region58: #{afnonet_forward.10} parent=0
    _
  %s15 = ssub.s32 1, %s13
  %s16 = scalar_select 0, %s15, %s13
  // Predicated region
  $region2: #{afnonet_forward.10} parent=0 // pred_check
    _
  $region3: #{afnonet_forward.10} parent=0 // pred_check_branch
    %18 = sbr.rel (0) target = $region5
  $region4: #{afnonet_forward.10} parent=0 // pred_region
    _
  $region5: #{afnonet_forward.10} parent=0 // pred_fallthru
    _
  // Predicated region
  $region6: #{afnonet_forward.10} parent=0 // pred_check
    _
  $region7: #{afnonet_forward.10} parent=0 // pred_check_branch
    %20 = sbr.rel (0) target = $region9
  $region8: #{afnonet_forward.10} parent=0 // pred_region
    _
  $region9: #{afnonet_forward.10} parent=0 // pred_fallthru
    _
  // Predicated region
  $region10: #{afnonet_forward.10} parent=0 // pred_check
    _
  $region11: #{afnonet_forward.10} parent=0 // pred_check_branch
    %22 = sbr.rel (0) target = $region13
  $region12: #{afnonet_forward.10} parent=0 // pred_region
    _
  $region13: #{afnonet_forward.10} parent=0 // pred_fallthru
    _
  // Predicated region
  $region14: #{afnonet_forward.10} parent=0 // pred_check
    _
  $region15: #{afnonet_forward.10} parent=0 // pred_check_branch
    %24 = sbr.rel (0) target = $region17
  $region16: #{afnonet_forward.10} parent=0 // pred_region
    _
  $region17: #{afnonet_forward.10} parent=0 // pred_fallthru
    _
  // Predicated region
  $region18: #{afnonet_forward.10} parent=0 // pred_check
    _
  $region19: #{afnonet_forward.10} parent=0 // pred_check_branch
    %26 = sbr.rel (0) target = $region21
  $region20: #{afnonet_forward.10} parent=0 // pred_region
    _
  $region21: #{afnonet_forward.10} parent=0 // pred_fallthru
    _
  // Predicated region
  $region22: #{afnonet_forward.10} parent=0 // pred_check
    _
  $region23: #{afnonet_forward.10} parent=0 // pred_check_branch
    %28 = sbr.rel (0) target = $region25
  $region24: #{afnonet_forward.10} parent=0 // pred_region
    _
  $region25: #{afnonet_forward.10} parent=0 // pred_fallthru
    _
  // Predicated region
  $region26: #{afnonet_forward.10} parent=0 // pred_check
    _
  $region27: #{afnonet_forward.10} parent=0 // pred_check_branch
    %30 = sbr.rel (0) target = $region29
  $region28: #{afnonet_forward.10} parent=0 // pred_region
    _
  $region29: #{afnonet_forward.10} parent=0 // pred_fallthru
    _
  // Predicated region
  $region30: #{afnonet_forward.10} parent=0 // pred_check
    _
  $region31: #{afnonet_forward.10} parent=0 // pred_check_branch
    %32 = sbr.rel (0) target = $region33
  $region32: #{afnonet_forward.10} parent=0 // pred_region
    _
  $region33: #{afnonet_forward.10} parent=0 // pred_fallthru
    _
  // Predicated region
  $region34: #{afnonet_forward.10} parent=0 // pred_check
    _
  $region35: #{afnonet_forward.10} parent=0 // pred_check_branch
    %34 = sbr.rel (0) target = $region37
  $region36: #{afnonet_forward.10} parent=0 // pred_region
    _
  $region37: #{afnonet_forward.10} parent=0 // pred_fallthru
    _
  // Predicated region
  $region38: #{afnonet_forward.10} parent=0 // pred_check
    _
  $region39: #{afnonet_forward.10} parent=0 // pred_check_branch
    %36 = sbr.rel (0) target = $region41
  $region40: #{afnonet_forward.10} parent=0 // pred_region
    _
  $region41: #{afnonet_forward.10} parent=0 // pred_fallthru
    _
  %v38 = vld [vmem:[%s0] sm:$0xff]
  %v39 = vld [vmem:[%s0 + $0x8] sm:$0xff]
  %v40 = vld [vmem:[%s0 + $0x10] sm:$0xff]
  %v41 = vpack.c.bf16 %v39, %v38
  %v42 = vpack.c.bf16 %v40, %v40
  %v43 = vld [vmem:[%s1] sm:$0xff]
  %v44 = vld [vmem:[%s1 + $0x8] sm:$0xff]
  %v45 = vld [vmem:[%s1 + $0x10] sm:$0xff]
  %v46 = vpack.c.bf16 %v44, %v43
  %v47 = vpack.c.bf16 %v45, %v45
  %v48 = vld [vmem:[%s2] sm:$0xf]
  %v49 = vld [vmem:[%s2 + $0x4] sm:$0xf]
  %v50 = vld [vmem:[%s2 + $0x8] sm:$0xf]
  %v51 = vld [vmem:[%s2 + $0xc] sm:$0xf]
  %v52 = vld [vmem:[%s3] sm:$0xf]
  %v53 = vld [vmem:[%s3 + $0x4] sm:$0xf]
  %v54 = vld [vmem:[%s3 + $0x8] sm:$0xf]
  %v55 = vld [vmem:[%s3 + $0xc] sm:$0xf]
  %v60 = vunpack.c.l.b16 %v52
  %v61 = vunpack.c.l.b16 %v53
  %v62 = vunpack.c.l.b16 %v54
  %v63 = vunpack.c.l.b16 %v55
  %v64 = vpack.c.b16 %v61, %v60
  %v65 = vpack.c.b16 %v63, %v62
  %vm68 = vcmask 261120
  %v70 = vsel %vm68, %v46, 0
  %v73 = vsel %vm68, %v47, 0
  %75 = vmatprep.subr.bf16.mxu0 0
  %76 = vmatpush1.bf16.msra.mxu0 %v64
  %77 = vmatprep.subr.bf16.mxu0 0
  %78 = vmatpush1.bf16.msra.mxu0 %v65
  %79 = vmatprep.subr.bf16.mxu0 0
  %80 = vmatpush1.bf16.msra.mxu0 0
  %81 = vmatprep.subr.bf16.mxu0 0
  %82 = vmatpush1.bf16.msra.mxu0 0
  %83 = vmatprep.subr.bf16.mxu0 0
  %84 = vmatpush1.bf16.msra.mxu0 0
  %85 = vmatprep.subr.bf16.mxu0 0
  %86 = vmatpush1.bf16.msra.mxu0 0
  %87 = vmatprep.subr.bf16.mxu0 0
  %88 = vmatpush1.bf16.msra.mxu0 0
  %89 = vmatprep.subr.bf16.mxu0 0
  %90 = vmatpush1.bf16.msra.mxu0 0
  %91 = vmatprep.subr.bf16.mxu0 0
  %92 = vmatpush1.bf16.msra.mxu0 0
  %93 = vmatprep.subr.bf16.mxu0 0
  %94 = vmatpush1.bf16.msra.mxu0 0
  %95 = vmatprep.subr.bf16.mxu0 0
  %96 = vmatpush1.bf16.msra.mxu0 0
  %97 = vmatprep.subr.bf16.mxu0 0
  %98 = vmatpush1.bf16.msra.mxu0 0
  %99 = vmatprep.subr.bf16.mxu0 0
  %100 = vmatpush1.bf16.msra.mxu0 0
  %101 = vmatprep.subr.bf16.mxu0 0
  %102 = vmatpush1.bf16.msra.mxu0 0
  %103 = vmatprep.subr.bf16.mxu0 0
  %104 = vmatpush1.bf16.msra.mxu0 0
  %105 = vmatprep.subr.bf16.mxu0 0
  %106 = vmatpush1.bf16.msra.mxu0 0
  %107 = vmatprep.mubr.bf16.mxu0 0
  %108 = vmatmul.mubr.bf16.gmra.mrb[0].mxu0 %v70
  %v109 = vpop.f32.mrb[0].mxu0
  %v110 = vadd.f32 0.0, %v109
  %v111 = vpop.f32.mrb[0].mxu0
  %v112 = vpop.f32.mrb[0].mxu0
  %v113 = vadd.f32 0.0, %v112
  %v114 = vpop.f32.mrb[0].mxu0
  %115 = vmatprep.mubr.bf16.mxu0 0
  %116 = vmatmul.mubr.bf16.gmra.mrb[0].mxu0 %v73
  %v117 = vpop.f32.mrb[0].mxu0
  %v118 = vadd.f32 0.0, %v117
  %v119 = vpop.f32.mrb[0].mxu0
  %v120 = vpop.f32.mrb[0].mxu0
  %v121 = vpop.f32.mrb[0].mxu0
  %122 = vdwg.mxu0
  %v127 = vunpack.c.l.b16 %v48
  %v128 = vunpack.c.l.b16 %v49
  %v129 = vunpack.c.l.b16 %v50
  %v130 = vunpack.c.l.b16 %v51
  %v131 = vpack.c.b16 %v128, %v127
  %v132 = vpack.c.b16 %v130, %v129
  %v136 = vsel %vm68, %v41, 0
  %v139 = vsel %vm68, %v42, 0
  %141 = vmatprep.subr.bf16.mxu0 0
  %142 = vmatpush1.bf16.msra.mxu0 %v131
  %143 = vmatprep.subr.bf16.mxu0 0
  %144 = vmatpush1.bf16.msra.mxu0 %v132
  %145 = vmatprep.subr.bf16.mxu0 0
  %146 = vmatpush1.bf16.msra.mxu0 0
  %147 = vmatprep.subr.bf16.mxu0 0
  %148 = vmatpush1.bf16.msra.mxu0 0
  %149 = vmatprep.subr.bf16.mxu0 0
  %150 = vmatpush1.bf16.msra.mxu0 0
  %151 = vmatprep.subr.bf16.mxu0 0
  %152 = vmatpush1.bf16.msra.mxu0 0
  %153 = vmatprep.subr.bf16.mxu0 0
  %154 = vmatpush1.bf16.msra.mxu0 0
  %155 = vmatprep.subr.bf16.mxu0 0
  %156 = vmatpush1.bf16.msra.mxu0 0
  %157 = vmatprep.subr.bf16.mxu0 0
  %158 = vmatpush1.bf16.msra.mxu0 0
  %159 = vmatprep.subr.bf16.mxu0 0
  %160 = vmatpush1.bf16.msra.mxu0 0
  %161 = vmatprep.subr.bf16.mxu0 0
  %162 = vmatpush1.bf16.msra.mxu0 0
  %163 = vmatprep.subr.bf16.mxu0 0
  %164 = vmatpush1.bf16.msra.mxu0 0
  %165 = vmatprep.subr.bf16.mxu0 0
  %166 = vmatpush1.bf16.msra.mxu0 0
  %167 = vmatprep.subr.bf16.mxu0 0
  %168 = vmatpush1.bf16.msra.mxu0 0
  %169 = vmatprep.subr.bf16.mxu0 0
  %170 = vmatpush1.bf16.msra.mxu0 0
  %171 = vmatprep.subr.bf16.mxu0 0
  %172 = vmatpush1.bf16.msra.mxu0 0
  %173 = vmatprep.mubr.bf16.mxu0 0
  %174 = vmatmul.mubr.bf16.gmra.mrb[0].mxu0 %v136
  %v175 = vpop.f32.mrb[0].mxu0
  %v176 = vadd.f32 %v110, %v175
  %v177 = vpop.f32.mrb[0].mxu0
  %v178 = vpop.f32.mrb[0].mxu0
  %v179 = vadd.f32 %v113, %v178
  %v180 = vpop.f32.mrb[0].mxu0
  %181 = vmatprep.mubr.bf16.mxu0 0
  %182 = vmatmul.mubr.bf16.gmra.mrb[0].mxu0 %v139
  %v183 = vpop.f32.mrb[0].mxu0
  %v184 = vadd.f32 %v118, %v183
  %v185 = vpop.f32.mrb[0].mxu0
  %v186 = vpop.f32.mrb[0].mxu0
  %v187 = vpop.f32.mrb[0].mxu0
  %188 = vdwg.mxu0
  %v189 = vld [vmem:[%s4] sm:$0x1]
  %v191 = vlaneseq
  %v192 = vshrl.u32 %v191, 7
  %v193 = vsub.s32 0, %v192
  %v194 = vrot.slane %v189, %v193
  %v196 = vadd.f32 %v176, %v194
  %v197 = vadd.f32 %v179, %v194
  %v198 = vadd.f32 %v184, %v194
  %v199 = vmax.f32 %v196, 0.0
  %v200 = vmax.f32 %v197, 0.0
  %v201 = vmax.f32 %v198, 0.0
  %v202 = vpack.c.bf16 %v200, %v199
  %v203 = vpack.c.bf16 %v201, %v201
  %v204 = vld [vmem:[%s5] sm:$0xf]
  %v205 = vld [vmem:[%s5 + $0x4] sm:$0xf]
  %v206 = vld [vmem:[%s5 + $0x8] sm:$0xf]
  %v207 = vld [vmem:[%s5 + $0xc] sm:$0xf]
  %v208 = vld [vmem:[%s5 + $0x10] sm:$0xf]
  %v209 = vld [vmem:[%s5 + $0x14] sm:$0xf]
  %v210 = vld [vmem:[%s5 + $0x18] sm:$0xf]
  %v211 = vld [vmem:[%s5 + $0x1c] sm:$0xf]
  %v212 = vld [vmem:[%s8] sm:$0x1]
  %v214 = vlaneseq
  %v215 = vshrl.u32 %v214, 7
  %v216 = vsub.s32 0, %v215
  %v217 = vrot.slane %v212, %v216
  %v227 = vunpack.c.l.b16 %v204
  %v228 = vunpack.c.l.b16 %v205
  %v229 = vunpack.c.l.b16 %v206
  %v230 = vunpack.c.l.b16 %v207
  %v231 = vunpack.c.l.b16 %v208
  %v232 = vunpack.c.l.b16 %v209
  %v233 = vunpack.c.l.b16 %v210
  %v234 = vunpack.c.l.b16 %v211
  %v235 = vpack.c.b16 %v228, %v227
  %v236 = vpack.c.b16 %v230, %v229
  %v237 = vpack.c.b16 %v232, %v231
  %v238 = vpack.c.b16 %v234, %v233
  %vm243 = vcmask 523264
  %v245 = vsel %vm243, %v202, 0
  %v248 = vsel %vm243, %v203, 0
  %250 = vmatprep.subr.bf16.mxu0 0
  %251 = vmatpush1.bf16.msra.mxu0 %v235
  %252 = vmatprep.subr.bf16.mxu0 0
  %253 = vmatpush1.bf16.msra.mxu0 %v236
  %254 = vmatprep.subr.bf16.mxu0 0
  %255 = vmatpush1.bf16.msra.mxu0 %v237
  %256 = vmatprep.subr.bf16.mxu0 0
  %257 = vmatpush1.bf16.msra.mxu0 %v238
  %258 = vmatprep.subr.bf16.mxu0 0
  %259 = vmatpush1.bf16.msra.mxu0 0
  %260 = vmatprep.subr.bf16.mxu0 0
  %261 = vmatpush1.bf16.msra.mxu0 0
  %262 = vmatprep.subr.bf16.mxu0 0
  %263 = vmatpush1.bf16.msra.mxu0 0
  %264 = vmatprep.subr.bf16.mxu0 0
  %265 = vmatpush1.bf16.msra.mxu0 0
  %266 = vmatprep.subr.bf16.mxu0 0
  %267 = vmatpush1.bf16.msra.mxu0 0
  %268 = vmatprep.subr.bf16.mxu0 0
  %269 = vmatpush1.bf16.msra.mxu0 0
  %270 = vmatprep.subr.bf16.mxu0 0
  %271 = vmatpush1.bf16.msra.mxu0 0
  %272 = vmatprep.subr.bf16.mxu0 0
  %273 = vmatpush1.bf16.msra.mxu0 0
  %274 = vmatprep.subr.bf16.mxu0 0
  %275 = vmatpush1.bf16.msra.mxu0 0
  %276 = vmatprep.subr.bf16.mxu0 0
  %277 = vmatpush1.bf16.msra.mxu0 0
  %278 = vmatprep.subr.bf16.mxu0 0
  %279 = vmatpush1.bf16.msra.mxu0 0
  %280 = vmatprep.subr.bf16.mxu0 0
  %281 = vmatpush1.bf16.msra.mxu0 0
  %282 = vmatprep.mubr.bf16.mxu0 0
  %283 = vmatmul.mubr.bf16.gmra.mrb[0].mxu0 %v245
  %v284 = vpop.f32.mrb[0].mxu0
  %v285 = vadd.f32 %v217, %v284
  %v286 = vpop.f32.mrb[0].mxu0
  %v287 = vpop.f32.mrb[0].mxu0
  %v288 = vadd.f32 %v217, %v287
  %v289 = vpop.f32.mrb[0].mxu0
  %290 = vmatprep.mubr.bf16.mxu0 0
  %291 = vmatmul.mubr.bf16.gmra.mrb[0].mxu0 %v248
  %v292 = vpop.f32.mrb[0].mxu0
  %v293 = vadd.f32 %v217, %v292
  %v294 = vpop.f32.mrb[0].mxu0
  %v295 = vpop.f32.mrb[0].mxu0
  %v296 = vpop.f32.mrb[0].mxu0
  %297 = vdwg.mxu0
  %v298 = vpack.c.bf16 %v288, %v285
  %v299 = vpack.c.bf16 %v293, %v293
  %v300 = vld [vmem:[%s7] sm:$0xf]
  %v301 = vld [vmem:[%s7 + $0x4] sm:$0xf]
  %v302 = vld [vmem:[%s7 + $0x8] sm:$0xf]
  %v303 = vld [vmem:[%s7 + $0xc] sm:$0xf]
  %v304 = vld [vmem:[%s6] sm:$0xf]
  %v305 = vld [vmem:[%s6 + $0x4] sm:$0xf]
  %v306 = vld [vmem:[%s6 + $0x8] sm:$0xf]
  %v307 = vld [vmem:[%s6 + $0xc] sm:$0xf]
  %v308 = vld [vmem:[%s6 + $0x10] sm:$0xf]
  %v309 = vld [vmem:[%s6 + $0x14] sm:$0xf]
  %v310 = vld [vmem:[%s6 + $0x18] sm:$0xf]
  %v311 = vld [vmem:[%s6 + $0x1c] sm:$0xf]
  %v320 = vunpack.c.l.b16 %v304
  %v321 = vunpack.c.l.b16 %v305
  %v322 = vunpack.c.l.b16 %v306
  %v323 = vunpack.c.l.b16 %v307
  %v324 = vunpack.c.l.b16 %v308
  %v325 = vunpack.c.l.b16 %v309
  %v326 = vunpack.c.l.b16 %v310
  %v327 = vunpack.c.l.b16 %v311
  %v328 = vpack.c.b16 %v321, %v320
  %v329 = vpack.c.b16 %v323, %v322
  %v330 = vpack.c.b16 %v325, %v324
  %v331 = vpack.c.b16 %v327, %v326
  %336 = vmatprep.subr.bf16.mxu0 0
  %337 = vmatpush1.bf16.msra.mxu0 %v328
  %338 = vmatprep.subr.bf16.mxu0 0
  %339 = vmatpush1.bf16.msra.mxu0 %v329
  %340 = vmatprep.subr.bf16.mxu0 0
  %341 = vmatpush1.bf16.msra.mxu0 %v330
  %342 = vmatprep.subr.bf16.mxu0 0
  %343 = vmatpush1.bf16.msra.mxu0 %v331
  %344 = vmatprep.subr.bf16.mxu0 0
  %345 = vmatpush1.bf16.msra.mxu0 0
  %346 = vmatprep.subr.bf16.mxu0 0
  %347 = vmatpush1.bf16.msra.mxu0 0
  %348 = vmatprep.subr.bf16.mxu0 0
  %349 = vmatpush1.bf16.msra.mxu0 0
  %350 = vmatprep.subr.bf16.mxu0 0
  %351 = vmatpush1.bf16.msra.mxu0 0
  %352 = vmatprep.subr.bf16.mxu0 0
  %353 = vmatpush1.bf16.msra.mxu0 0
  %354 = vmatprep.subr.bf16.mxu0 0
  %355 = vmatpush1.bf16.msra.mxu0 0
  %356 = vmatprep.subr.bf16.mxu0 0
  %357 = vmatpush1.bf16.msra.mxu0 0
  %358 = vmatprep.subr.bf16.mxu0 0
  %359 = vmatpush1.bf16.msra.mxu0 0
  %360 = vmatprep.subr.bf16.mxu0 0
  %361 = vmatpush1.bf16.msra.mxu0 0
  %362 = vmatprep.subr.bf16.mxu0 0
  %363 = vmatpush1.bf16.msra.mxu0 0
  %364 = vmatprep.subr.bf16.mxu0 0
  %365 = vmatpush1.bf16.msra.mxu0 0
  %366 = vmatprep.subr.bf16.mxu0 0
  %367 = vmatpush1.bf16.msra.mxu0 0
  %368 = vmatprep.mubr.bf16.mxu0 0
  %369 = vmatmul.mubr.bf16.gmra.mrb[0].mxu0 %v245
  %v370 = vpop.f32.mrb[0].mxu0
  %v371 = vadd.f32 0.0, %v370
  %v372 = vpop.f32.mrb[0].mxu0
  %v373 = vpop.f32.mrb[0].mxu0
  %v374 = vadd.f32 0.0, %v373
  %v375 = vpop.f32.mrb[0].mxu0
  %376 = vmatprep.mubr.bf16.mxu0 0
  %377 = vmatmul.mubr.bf16.gmra.mrb[0].mxu0 %v248
  %v378 = vpop.f32.mrb[0].mxu0
  %v379 = vadd.f32 0.0, %v378
  %v380 = vpop.f32.mrb[0].mxu0
  %v381 = vpop.f32.mrb[0].mxu0
  %v382 = vpop.f32.mrb[0].mxu0
  %383 = vdwg.mxu0
  %v388 = vunpack.c.l.b16 %v300
  %v389 = vunpack.c.l.b16 %v301
  %v390 = vunpack.c.l.b16 %v302
  %v391 = vunpack.c.l.b16 %v303
  %v392 = vpack.c.b16 %v389, %v388
  %v393 = vpack.c.b16 %v391, %v390
  %v397 = vsel %vm68, %v298, 0
  %v400 = vsel %vm68, %v299, 0
  %402 = vmatprep.subr.bf16.mxu0 0
  %403 = vmatpush1.bf16.msra.mxu0 %v392
  %404 = vmatprep.subr.bf16.mxu0 0
  %405 = vmatpush1.bf16.msra.mxu0 %v393
  %406 = vmatprep.subr.bf16.mxu0 0
  %407 = vmatpush1.bf16.msra.mxu0 0
  %408 = vmatprep.subr.bf16.mxu0 0
  %409 = vmatpush1.bf16.msra.mxu0 0
  %410 = vmatprep.subr.bf16.mxu0 0
  %411 = vmatpush1.bf16.msra.mxu0 0
  %412 = vmatprep.subr.bf16.mxu0 0
  %413 = vmatpush1.bf16.msra.mxu0 0
  %414 = vmatprep.subr.bf16.mxu0 0
  %415 = vmatpush1.bf16.msra.mxu0 0
  %416 = vmatprep.subr.bf16.mxu0 0
  %417 = vmatpush1.bf16.msra.mxu0 0
  %418 = vmatprep.subr.bf16.mxu0 0
  %419 = vmatpush1.bf16.msra.mxu0 0
  %420 = vmatprep.subr.bf16.mxu0 0
  %421 = vmatpush1.bf16.msra.mxu0 0
  %422 = vmatprep.subr.bf16.mxu0 0
  %423 = vmatpush1.bf16.msra.mxu0 0
  %424 = vmatprep.subr.bf16.mxu0 0
  %425 = vmatpush1.bf16.msra.mxu0 0
  %426 = vmatprep.subr.bf16.mxu0 0
  %427 = vmatpush1.bf16.msra.mxu0 0
  %428 = vmatprep.subr.bf16.mxu0 0
  %429 = vmatpush1.bf16.msra.mxu0 0
  %430 = vmatprep.subr.bf16.mxu0 0
  %431 = vmatpush1.bf16.msra.mxu0 0
  %432 = vmatprep.subr.bf16.mxu0 0
  %433 = vmatpush1.bf16.msra.mxu0 0
  %434 = vmatprep.mubr.bf16.mxu0 0
  %435 = vmatmul.mubr.bf16.gmra.mrb[0].mxu0 %v397
  %v436 = vpop.f32.mrb[0].mxu0
  %v437 = vadd.f32 %v371, %v436
  %v438 = vpop.f32.mrb[0].mxu0
  %v439 = vpop.f32.mrb[0].mxu0
  %v440 = vadd.f32 %v374, %v439
  %v441 = vpop.f32.mrb[0].mxu0
  %442 = vmatprep.mubr.bf16.mxu0 0
  %443 = vmatmul.mubr.bf16.gmra.mrb[0].mxu0 %v400
  %v444 = vpop.f32.mrb[0].mxu0
  %v445 = vadd.f32 %v379, %v444
  %v446 = vpop.f32.mrb[0].mxu0
  %v447 = vpop.f32.mrb[0].mxu0
  %v448 = vpop.f32.mrb[0].mxu0
  %449 = vdwg.mxu0
  %v450 = vld [vmem:[%s9] sm:$0x1]
  %v452 = vlaneseq
  %v453 = vshrl.u32 %v452, 7
  %v454 = vsub.s32 0, %v453
  %v455 = vrot.slane %v450, %v454
  %v457 = vadd.f32 %v437, %v455
  %v458 = vadd.f32 %v440, %v455
  %v459 = vadd.f32 %v445, %v455
  %460 = vst.msk [vmem:[%s10] sm:$0xff] %vm68, %v285
  %461 = vst.msk [vmem:[%s10 + $0x8] sm:$0xff] %vm68, %v288
  %462 = vst.msk [vmem:[%s10 + $0x10] sm:$0xff] %vm68, %v293
  %463 = vst.msk [vmem:[%s11] sm:$0xff] %vm68, %v457
  %464 = vst.msk [vmem:[%s11 + $0x8] sm:$0xff] %vm68, %v458
  %465 = vst.msk [vmem:[%s11 + $0x10] sm:$0xff] %vm68, %v459
  // Predicated region
  $region42: #{afnonet_forward.10} parent=0 // pred_check
    _
  $region43: #{afnonet_forward.10} parent=0 // pred_check_branch
    %467 = sbr.rel (0) target = $region45
  $region44: #{afnonet_forward.10} parent=0 // pred_region
    _
  $region45: #{afnonet_forward.10} parent=0 // pred_fallthru
    _
  // Predicated region
  $region46: #{afnonet_forward.10} parent=0 // pred_check
    _
  $region47: #{afnonet_forward.10} parent=0 // pred_check_branch
    %469 = sbr.rel (0) target = $region49
  $region48: #{afnonet_forward.10} parent=0 // pred_region
    _
  $region49: #{afnonet_forward.10} parent=0 // pred_fallthru
    _
  // Predicated region
  $region50: #{afnonet_forward.10} parent=0 // pred_check
    _
  $region51: #{afnonet_forward.10} parent=0 // pred_check_branch
    %471 = sbr.rel (0) target = $region53
  $region52: #{afnonet_forward.10} parent=0 // pred_region
    _
  $region53: #{afnonet_forward.10} parent=0 // pred_fallthru
    _
  // Predicated region
  $region54: #{afnonet_forward.10} parent=0 // pred_check
    _
  $region55: #{afnonet_forward.10} parent=0 // pred_check_branch
    %473 = sbr.rel (0) target = $region57
  $region56: #{afnonet_forward.10} parent=0 // pred_region
    _
  $region57: #{afnonet_forward.10} parent=0 // pred_fallthru
    _

// kernel: afnonet_forward.15
$region0: #{afnonet_forward.15}
  #allocation0 [shape = 'u32[]', space=smem, size = 0x4, offset = 0x4, fixed_abs, tag = 'smem constant byte address 0x4 - core index']
  #allocation1 [shape = 'u32[144,128]{1,0:T(1,128)}', space=vmem, size = 0x12000, scoped, tag = 'internal scratch']
  %s0 = inlined_call_operand.vmem [shape: f32[32,32], index: 0, kind: input, shape index: {}]
  %s1 = inlined_call_operand.vmem [shape: f32[1,32], index: 1, kind: input, shape index: {}]
  %s2 = inlined_call_operand.vmem [shape: f32[1,32], index: 2, kind: input, shape index: {}]
  %s3 = inlined_call_operand.vmem [shape: bf16[32,4], index: 3, kind: input, shape index: {}]
  %s4 = inlined_call_operand.vmem [shape: f32[1,4], index: 4, kind: input, shape index: {}]
  %s5 = inlined_call_operand.vmem [shape: f32[32,4], index: 5, kind: output, shape index: {}]
  %s6 = sld [smem:[#allocation0]]
  $region30: #{afnonet_forward.15} parent=0
    _
  %s8 = ssub.s32 1, %s6
  %s9 = scalar_select 0, %s8, %s6
  // Predicated region
  $region2: #{afnonet_forward.15} parent=0 // pred_check
    _
  $region3: #{afnonet_forward.15} parent=0 // pred_check_branch
    %11 = sbr.rel (0) target = $region5
  $region4: #{afnonet_forward.15} parent=0 // pred_region
    _
  $region5: #{afnonet_forward.15} parent=0 // pred_fallthru
    _
  // Predicated region
  $region6: #{afnonet_forward.15} parent=0 // pred_check
    _
  $region7: #{afnonet_forward.15} parent=0 // pred_check_branch
    %13 = sbr.rel (0) target = $region9
  $region8: #{afnonet_forward.15} parent=0 // pred_region
    _
  $region9: #{afnonet_forward.15} parent=0 // pred_fallthru
    _
  // Predicated region
  $region10: #{afnonet_forward.15} parent=0 // pred_check
    _
  $region11: #{afnonet_forward.15} parent=0 // pred_check_branch
    %15 = sbr.rel (0) target = $region13
  $region12: #{afnonet_forward.15} parent=0 // pred_region
    _
  $region13: #{afnonet_forward.15} parent=0 // pred_fallthru
    _
  // Predicated region
  $region14: #{afnonet_forward.15} parent=0 // pred_check
    _
  $region15: #{afnonet_forward.15} parent=0 // pred_check_branch
    %17 = sbr.rel (0) target = $region17
  $region16: #{afnonet_forward.15} parent=0 // pred_region
    _
  $region17: #{afnonet_forward.15} parent=0 // pred_fallthru
    _
  // Predicated region
  $region18: #{afnonet_forward.15} parent=0 // pred_check
    _
  $region19: #{afnonet_forward.15} parent=0 // pred_check_branch
    %19 = sbr.rel (0) target = $region21
  $region20: #{afnonet_forward.15} parent=0 // pred_region
    _
  $region21: #{afnonet_forward.15} parent=0 // pred_fallthru
    _
  %v21 = vld [vmem:[%s0] sm:$0xff]
  %v22 = vld [vmem:[%s0 + $0x8] sm:$0xff]
  %v23 = vld [vmem:[%s0 + $0x10] sm:$0xff]
  %v24 = vld [vmem:[%s0 + $0x18] sm:$0xff]
  %v25 = vld [vmem:[%s1] sm:$0x1]
  %v26 = vld [vmem:[%s2] sm:$0x1]
  %vm27 = vcmask 261120
  %v28 = vsel %vm27, %v21, 0.0
  %29 = vadd.xlane.f32.xlu0 %v28
  %v30 = vpop.xlane.xlu0 %29
  %v31 = vsel %vm27, %v22, 0.0
  %32 = vadd.xlane.f32.xlu0 %v31
  %v33 = vpop.xlane.xlu0 %32
  %v34 = vsel %vm27, %v23, 0.0
  %35 = vadd.xlane.f32.xlu0 %v34
  %v36 = vpop.xlane.xlu0 %35
  %v37 = vsel %vm27, %v24, 0.0
  %38 = vadd.xlane.f32.xlu0 %v37
  %v39 = vpop.xlane.xlu0 %38
  %v40 = vrcp.pop 32.0
  %v41 = vmul.f32 %v30, %v40
  %v42 = vmul.f32 %v33, %v40
  %v43 = vmul.f32 %v36, %v40
  %v44 = vmul.f32 %v39, %v40
  %v45 = vsub.f32 %v21, %v41
  %v46 = vsub.f32 %v22, %v42
  %v47 = vsub.f32 %v23, %v43
  %v48 = vsub.f32 %v24, %v44
  %v49 = vmul.f32 %v45, %v45
  %v50 = vmul.f32 %v46, %v46
  %v51 = vmul.f32 %v47, %v47
  %v52 = vmul.f32 %v48, %v48
  %v53 = vsel %vm27, %v49, 0.0
  %54 = vadd.xlane.f32.xlu0 %v53
  %v55 = vpop.xlane.xlu0 %54
  %v56 = vsel %vm27, %v50, 0.0
  %57 = vadd.xlane.f32.xlu0 %v56
  %v58 = vpop.xlane.xlu0 %57
  %v59 = vsel %vm27, %v51, 0.0
  %60 = vadd.xlane.f32.xlu0 %v59
  %v61 = vpop.xlane.xlu0 %60
  %v62 = vsel %vm27, %v52, 0.0
  %63 = vadd.xlane.f32.xlu0 %v62
  %v64 = vpop.xlane.xlu0 %63
  %v65 = vmul.f32 %v55, %v40
  %v66 = vmul.f32 %v58, %v40
  %v67 = vmul.f32 %v61, %v40
  %v68 = vmul.f32 %v64, %v40
  %v69 = vadd.f32 %v65, 1e-06
  %v70 = vadd.f32 %v66, 1e-06
  %v71 = vadd.f32 %v67, 1e-06
  %v72 = vadd.f32 %v68, 1e-06
  %v73 = vrsqrt.pop %v69
  %v74 = vrsqrt.pop %v70
  %v75 = vrsqrt.pop %v71
  %v76 = vrsqrt.pop %v72
  %v77 = vmul.f32 %v45, %v73
  %v78 = vmul.f32 %v46, %v74
  %v79 = vmul.f32 %v47, %v75
  %v80 = vmul.f32 %v48, %v76
  %v82 = vlaneseq
  %v83 = vshrl.u32 %v82, 7
  %v84 = vsub.s32 0, %v83
  %v85 = vrot.slane %v25, %v84
  %v87 = vmul.f32 %v77, %v85
  %v88 = vmul.f32 %v78, %v85
  %v89 = vmul.f32 %v79, %v85
  %v90 = vmul.f32 %v80, %v85
  %v92 = vlaneseq
  %v93 = vshrl.u32 %v92, 7
  %v94 = vsub.s32 0, %v93
  %v95 = vrot.slane %v26, %v94
  %v97 = vadd.f32 %v87, %v95
  %v98 = vadd.f32 %v88, %v95
  %v99 = vadd.f32 %v89, %v95
  %v100 = vadd.f32 %v90, %v95
  %v101 = vpack.c.bf16 %v98, %v97
  %v102 = vpack.c.bf16 %v100, %v99
  %v103 = vld [vmem:[%s3] sm:$0xf]
  %v104 = vld [vmem:[%s3 + $0x4] sm:$0xf]
  %v105 = vld [vmem:[%s3 + $0x8] sm:$0xf]
  %v106 = vld [vmem:[%s3 + $0xc] sm:$0xf]
  %v107 = vld [vmem:[%s4] sm:$0x1]
  %v109 = vlaneseq
  %v110 = vshrl.u32 %v109, 7
  %v111 = vsub.s32 0, %v110
  %v112 = vrot.slane %v107, %v111
  %v118 = vunpack.c.l.b16 %v103
  %v119 = vunpack.c.l.b16 %v104
  %v120 = vunpack.c.l.b16 %v105
  %v121 = vunpack.c.l.b16 %v106
  %v122 = vpack.c.b16 %v119, %v118
  %v123 = vpack.c.b16 %v121, %v120
  %v127 = vsel %vm27, %v101, 0
  %v130 = vsel %vm27, %v102, 0
  %132 = vmatprep.subr.bf16.mxu0 0
  %133 = vmatpush1.bf16.msra.mxu0 %v122
  %134 = vmatprep.subr.bf16.mxu0 0
  %135 = vmatpush1.bf16.msra.mxu0 %v123
  %136 = vmatprep.subr.bf16.mxu0 0
  %137 = vmatpush1.bf16.msra.mxu0 0
  %138 = vmatprep.subr.bf16.mxu0 0
  %139 = vmatpush1.bf16.msra.mxu0 0
  %140 = vmatprep.subr.bf16.mxu0 0
  %141 = vmatpush1.bf16.msra.mxu0 0
  %142 = vmatprep.subr.bf16.mxu0 0
  %143 = vmatpush1.bf16.msra.mxu0 0
  %144 = vmatprep.subr.bf16.mxu0 0
  %145 = vmatpush1.bf16.msra.mxu0 0
  %146 = vmatprep.subr.bf16.mxu0 0
  %147 = vmatpush1.bf16.msra.mxu0 0
  %148 = vmatprep.subr.bf16.mxu0 0
  %149 = vmatpush1.bf16.msra.mxu0 0
  %150 = vmatprep.subr.bf16.mxu0 0
  %151 = vmatpush1.bf16.msra.mxu0 0
  %152 = vmatprep.subr.bf16.mxu0 0
  %153 = vmatpush1.bf16.msra.mxu0 0
  %154 = vmatprep.subr.bf16.mxu0 0
  %155 = vmatpush1.bf16.msra.mxu0 0
  %156 = vmatprep.subr.bf16.mxu0 0
  %157 = vmatpush1.bf16.msra.mxu0 0
  %158 = vmatprep.subr.bf16.mxu0 0
  %159 = vmatpush1.bf16.msra.mxu0 0
  %160 = vmatprep.subr.bf16.mxu0 0
  %161 = vmatpush1.bf16.msra.mxu0 0
  %162 = vmatprep.subr.bf16.mxu0 0
  %163 = vmatpush1.bf16.msra.mxu0 0
  %164 = vmatprep.mubr.bf16.mxu0 0
  %165 = vmatmul.mubr.bf16.gmra.mrb[0].mxu0 %v127
  %v166 = vpop.f32.mrb[0].mxu0
  %v167 = vadd.f32 %v112, %v166
  %v168 = vpop.f32.mrb[0].mxu0
  %v169 = vpop.f32.mrb[0].mxu0
  %v170 = vadd.f32 %v112, %v169
  %v171 = vpop.f32.mrb[0].mxu0
  %172 = vmatprep.mubr.bf16.mxu0 0
  %173 = vmatmul.mubr.bf16.gmra.mrb[0].mxu0 %v130
  %v174 = vpop.f32.mrb[0].mxu0
  %v175 = vadd.f32 %v112, %v174
  %v176 = vpop.f32.mrb[0].mxu0
  %v177 = vpop.f32.mrb[0].mxu0
  %v178 = vadd.f32 %v112, %v177
  %v179 = vpop.f32.mrb[0].mxu0
  %180 = vdwg.mxu0
  %vm181 = vcmask 31744
  %182 = vst.msk [vmem:[%s5] sm:$0xff] %vm181, %v167
  %183 = vst.msk [vmem:[%s5 + $0x8] sm:$0xff] %vm181, %v170
  %184 = vst.msk [vmem:[%s5 + $0x10] sm:$0xff] %vm181, %v175
  %185 = vst.msk [vmem:[%s5 + $0x18] sm:$0xff] %vm181, %v178
  // Predicated region
  $region22: #{afnonet_forward.15} parent=0 // pred_check
    _
  $region23: #{afnonet_forward.15} parent=0 // pred_check_branch
    %187 = sbr.rel (0) target = $region25
  $region24: #{afnonet_forward.15} parent=0 // pred_region
    _
  $region25: #{afnonet_forward.15} parent=0 // pred_fallthru
    _
  // Predicated region
  $region26: #{afnonet_forward.15} parent=0 // pred_check
    _
  $region27: #{afnonet_forward.15} parent=0 // pred_check_branch
    %189 = sbr.rel (0) target = $region29
  $region28: #{afnonet_forward.15} parent=0 // pred_region
    _
  $region29: #{afnonet_forward.15} parent=0 // pred_fallthru
    _

// kernel: afnonet_forward.11
$region0: #{afnonet_forward.11}
  #allocation0 [shape = 'u32[]', space=smem, size = 0x4, offset = 0x4, fixed_abs, tag = 'smem constant byte address 0x4 - core index']
  #allocation1 [shape = 'u32[144,128]{1,0:T(1,128)}', space=vmem, size = 0x12000, scoped, tag = 'internal scratch']
  %s0 = inlined_call_operand.vmem [shape: f32[32,32], index: 0, kind: input, shape index: {}]
  %s1 = inlined_call_operand.vmem [shape: f32[32,32], index: 1, kind: input, shape index: {}]
  %s2 = inlined_call_operand.vmem [shape: f32[32,32], index: 2, kind: input, shape index: {}]
  %s3 = inlined_call_operand.vmem [shape: bf16[32,32], index: 3, kind: input, shape index: {}]
  %s4 = inlined_call_operand.vmem [shape: f32[1,32], index: 4, kind: input, shape index: {}]
  %s5 = inlined_call_operand.vmem [shape: f32[1,32], index: 5, kind: input, shape index: {}]
  %s6 = inlined_call_operand.vmem [shape: f32[1,32], index: 6, kind: input, shape index: {}]
  %s7 = inlined_call_operand.vmem [shape: bf16[32,128], index: 7, kind: input, shape index: {}]
  %s8 = inlined_call_operand.vmem [shape: f32[1,128], index: 8, kind: input, shape index: {}]
  %s9 = inlined_call_operand.vmem [shape: bf16[128,32], index: 9, kind: input, shape index: {}]
  %s10 = inlined_call_operand.vmem [shape: f32[32,32], index: 10, kind: output, shape index: {}]
  %s11 = sld [smem:[#allocation0]]
  $region50: #{afnonet_forward.11} parent=0
    _
  %s13 = ssub.s32 1, %s11
  %s14 = scalar_select 0, %s13, %s11
  // Predicated region
  $region2: #{afnonet_forward.11} parent=0 // pred_check
    _
  $region3: #{afnonet_forward.11} parent=0 // pred_check_branch
    %16 = sbr.rel (0) target = $region5
  $region4: #{afnonet_forward.11} parent=0 // pred_region
    _
  $region5: #{afnonet_forward.11} parent=0 // pred_fallthru
    _
  // Predicated region
  $region6: #{afnonet_forward.11} parent=0 // pred_check
    _
  $region7: #{afnonet_forward.11} parent=0 // pred_check_branch
    %18 = sbr.rel (0) target = $region9
  $region8: #{afnonet_forward.11} parent=0 // pred_region
    _
  $region9: #{afnonet_forward.11} parent=0 // pred_fallthru
    _
  // Predicated region
  $region10: #{afnonet_forward.11} parent=0 // pred_check
    _
  $region11: #{afnonet_forward.11} parent=0 // pred_check_branch
    %20 = sbr.rel (0) target = $region13
  $region12: #{afnonet_forward.11} parent=0 // pred_region
    _
  $region13: #{afnonet_forward.11} parent=0 // pred_fallthru
    _
  // Predicated region
  $region14: #{afnonet_forward.11} parent=0 // pred_check
    _
  $region15: #{afnonet_forward.11} parent=0 // pred_check_branch
    %22 = sbr.rel (0) target = $region17
  $region16: #{afnonet_forward.11} parent=0 // pred_region
    _
  $region17: #{afnonet_forward.11} parent=0 // pred_fallthru
    _
  // Predicated region
  $region18: #{afnonet_forward.11} parent=0 // pred_check
    _
  $region19: #{afnonet_forward.11} parent=0 // pred_check_branch
    %24 = sbr.rel (0) target = $region21
  $region20: #{afnonet_forward.11} parent=0 // pred_region
    _
  $region21: #{afnonet_forward.11} parent=0 // pred_fallthru
    _
  // Predicated region
  $region22: #{afnonet_forward.11} parent=0 // pred_check
    _
  $region23: #{afnonet_forward.11} parent=0 // pred_check_branch
    %26 = sbr.rel (0) target = $region25
  $region24: #{afnonet_forward.11} parent=0 // pred_region
    _
  $region25: #{afnonet_forward.11} parent=0 // pred_fallthru
    _
  // Predicated region
  $region26: #{afnonet_forward.11} parent=0 // pred_check
    _
  $region27: #{afnonet_forward.11} parent=0 // pred_check_branch
    %28 = sbr.rel (0) target = $region29
  $region28: #{afnonet_forward.11} parent=0 // pred_region
    _
  $region29: #{afnonet_forward.11} parent=0 // pred_fallthru
    _
  // Predicated region
  $region30: #{afnonet_forward.11} parent=0 // pred_check
    _
  $region31: #{afnonet_forward.11} parent=0 // pred_check_branch
    %30 = sbr.rel (0) target = $region33
  $region32: #{afnonet_forward.11} parent=0 // pred_region
    _
  $region33: #{afnonet_forward.11} parent=0 // pred_fallthru
    _
  // Predicated region
  $region34: #{afnonet_forward.11} parent=0 // pred_check
    _
  $region35: #{afnonet_forward.11} parent=0 // pred_check_branch
    %32 = sbr.rel (0) target = $region37
  $region36: #{afnonet_forward.11} parent=0 // pred_region
    _
  $region37: #{afnonet_forward.11} parent=0 // pred_fallthru
    _
  // Predicated region
  $region38: #{afnonet_forward.11} parent=0 // pred_check
    _
  $region39: #{afnonet_forward.11} parent=0 // pred_check_branch
    %34 = sbr.rel (0) target = $region41
  $region40: #{afnonet_forward.11} parent=0 // pred_region
    _
  $region41: #{afnonet_forward.11} parent=0 // pred_fallthru
    _
  %v36 = vld [vmem:[%s1] sm:$0xff]
  %v37 = vld [vmem:[%s1 + $0x8] sm:$0xff]
  %v38 = vld [vmem:[%s1 + $0x10] sm:$0xff]
  %v39 = vld [vmem:[%s1 + $0x18] sm:$0xff]
  %v40 = vpack.c.bf16 %v37, %v36
  %v41 = vpack.c.bf16 %v39, %v38
  %v42 = vld [vmem:[%s3] sm:$0xf]
  %v43 = vld [vmem:[%s3 + $0x4] sm:$0xf]
  %v44 = vld [vmem:[%s3 + $0x8] sm:$0xf]
  %v45 = vld [vmem:[%s3 + $0xc] sm:$0xf]
  %v46 = vld [vmem:[%s4] sm:$0x1]
  %v48 = vlaneseq
  %v49 = vshrl.u32 %v48, 7
  %v50 = vsub.s32 0, %v49
  %v51 = vrot.slane %v46, %v50
  %v57 = vunpack.c.l.b16 %v42
  %v58 = vunpack.c.l.b16 %v43
  %v59 = vunpack.c.l.b16 %v44
  %v60 = vunpack.c.l.b16 %v45
  %v61 = vpack.c.b16 %v58, %v57
  %v62 = vpack.c.b16 %v60, %v59
  %vm65 = vcmask 261120
  %v67 = vsel %vm65, %v40, 0
  %v70 = vsel %vm65, %v41, 0
  %72 = vmatprep.subr.bf16.mxu0 0
  %73 = vmatpush1.bf16.msra.mxu0 %v61
  %74 = vmatprep.subr.bf16.mxu0 0
  %75 = vmatpush1.bf16.msra.mxu0 %v62
  %76 = vmatprep.subr.bf16.mxu0 0
  %77 = vmatpush1.bf16.msra.mxu0 0
  %78 = vmatprep.subr.bf16.mxu0 0
  %79 = vmatpush1.bf16.msra.mxu0 0
  %80 = vmatprep.subr.bf16.mxu0 0
  %81 = vmatpush1.bf16.msra.mxu0 0
  %82 = vmatprep.subr.bf16.mxu0 0
  %83 = vmatpush1.bf16.msra.mxu0 0
  %84 = vmatprep.subr.bf16.mxu0 0
  %85 = vmatpush1.bf16.msra.mxu0 0
  %86 = vmatprep.subr.bf16.mxu0 0
  %87 = vmatpush1.bf16.msra.mxu0 0
  %88 = vmatprep.subr.bf16.mxu0 0
  %89 = vmatpush1.bf16.msra.mxu0 0
  %90 = vmatprep.subr.bf16.mxu0 0
  %91 = vmatpush1.bf16.msra.mxu0 0
  %92 = vmatprep.subr.bf16.mxu0 0
  %93 = vmatpush1.bf16.msra.mxu0 0
  %94 = vmatprep.subr.bf16.mxu0 0
  %95 = vmatpush1.bf16.msra.mxu0 0
  %96 = vmatprep.subr.bf16.mxu0 0
  %97 = vmatpush1.bf16.msra.mxu0 0
  %98 = vmatprep.subr.bf16.mxu0 0
  %99 = vmatpush1.bf16.msra.mxu0 0
  %100 = vmatprep.subr.bf16.mxu0 0
  %101 = vmatpush1.bf16.msra.mxu0 0
  %102 = vmatprep.subr.bf16.mxu0 0
  %103 = vmatpush1.bf16.msra.mxu0 0
  %104 = vmatprep.mubr.bf16.mxu0 0
  %105 = vmatmul.mubr.bf16.gmra.mrb[0].mxu0 %v67
  %v106 = vpop.f32.mrb[0].mxu0
  %v107 = vadd.f32 %v51, %v106
  %v108 = vpop.f32.mrb[0].mxu0
  %v109 = vpop.f32.mrb[0].mxu0
  %v110 = vadd.f32 %v51, %v109
  %v111 = vpop.f32.mrb[0].mxu0
  %112 = vmatprep.mubr.bf16.mxu0 0
  %113 = vmatmul.mubr.bf16.gmra.mrb[0].mxu0 %v70
  %v114 = vpop.f32.mrb[0].mxu0
  %v115 = vadd.f32 %v51, %v114
  %v116 = vpop.f32.mrb[0].mxu0
  %v117 = vpop.f32.mrb[0].mxu0
  %v118 = vadd.f32 %v51, %v117
  %v119 = vpop.f32.mrb[0].mxu0
  %120 = vdwg.mxu0
  %v121 = vld [vmem:[%s0] sm:$0xff]
  %v122 = vld [vmem:[%s0 + $0x8] sm:$0xff]
  %v123 = vld [vmem:[%s0 + $0x10] sm:$0xff]
  %v124 = vld [vmem:[%s0 + $0x18] sm:$0xff]
  %v125 = vadd.f32 %v121, %v107
  %v126 = vadd.f32 %v122, %v110
  %v127 = vadd.f32 %v123, %v115
  %v128 = vadd.f32 %v124, %v118
  %v129 = vld [vmem:[%s2] sm:$0xff]
  %v130 = vld [vmem:[%s2 + $0x8] sm:$0xff]
  %v131 = vld [vmem:[%s2 + $0x10] sm:$0xff]
  %v132 = vld [vmem:[%s2 + $0x18] sm:$0xff]
  %v133 = vadd.f32 %v125, %v129
  %v134 = vadd.f32 %v126, %v130
  %v135 = vadd.f32 %v127, %v131
  %v136 = vadd.f32 %v128, %v132
  %v137 = vld [vmem:[%s5] sm:$0x1]
  %v138 = vld [vmem:[%s6] sm:$0x1]
  %v139 = vsel %vm65, %v133, 0.0
  %140 = vadd.xlane.f32.xlu0 %v139
  %v141 = vpop.xlane.xlu0 %140
  %v142 = vsel %vm65, %v134, 0.0
  %143 = vadd.xlane.f32.xlu0 %v142
  %v144 = vpop.xlane.xlu0 %143
  %v145 = vsel %vm65, %v135, 0.0
  %146 = vadd.xlane.f32.xlu0 %v145
  %v147 = vpop.xlane.xlu0 %146
  %v148 = vsel %vm65, %v136, 0.0
  %149 = vadd.xlane.f32.xlu0 %v148
  %v150 = vpop.xlane.xlu0 %149
  %v151 = vrcp.pop 32.0
  %v152 = vmul.f32 %v141, %v151
  %v153 = vmul.f32 %v144, %v151
  %v154 = vmul.f32 %v147, %v151
  %v155 = vmul.f32 %v150, %v151
  %v156 = vsub.f32 %v133, %v152
  %v157 = vsub.f32 %v134, %v153
  %v158 = vsub.f32 %v135, %v154
  %v159 = vsub.f32 %v136, %v155
  %v160 = vmul.f32 %v156, %v156
  %v161 = vmul.f32 %v157, %v157
  %v162 = vmul.f32 %v158, %v158
  %v163 = vmul.f32 %v159, %v159
  %v164 = vsel %vm65, %v160, 0.0
  %165 = vadd.xlane.f32.xlu0 %v164
  %v166 = vpop.xlane.xlu0 %165
  %v167 = vsel %vm65, %v161, 0.0
  %168 = vadd.xlane.f32.xlu0 %v167
  %v169 = vpop.xlane.xlu0 %168
  %v170 = vsel %vm65, %v162, 0.0
  %171 = vadd.xlane.f32.xlu0 %v170
  %v172 = vpop.xlane.xlu0 %171
  %v173 = vsel %vm65, %v163, 0.0
  %174 = vadd.xlane.f32.xlu0 %v173
  %v175 = vpop.xlane.xlu0 %174
  %v176 = vmul.f32 %v166, %v151
  %v177 = vmul.f32 %v169, %v151
  %v178 = vmul.f32 %v172, %v151
  %v179 = vmul.f32 %v175, %v151
  %v180 = vadd.f32 %v176, 1e-06
  %v181 = vadd.f32 %v177, 1e-06
  %v182 = vadd.f32 %v178, 1e-06
  %v183 = vadd.f32 %v179, 1e-06
  %v184 = vrsqrt.pop %v180
  %v185 = vrsqrt.pop %v181
  %v186 = vrsqrt.pop %v182
  %v187 = vrsqrt.pop %v183
  %v188 = vmul.f32 %v156, %v184
  %v189 = vmul.f32 %v157, %v185
  %v190 = vmul.f32 %v158, %v186
  %v191 = vmul.f32 %v159, %v187
  %v193 = vlaneseq
  %v194 = vshrl.u32 %v193, 7
  %v195 = vsub.s32 0, %v194
  %v196 = vrot.slane %v137, %v195
  %v198 = vmul.f32 %v188, %v196
  %v199 = vmul.f32 %v189, %v196
  %v200 = vmul.f32 %v190, %v196
  %v201 = vmul.f32 %v191, %v196
  %v203 = vlaneseq
  %v204 = vshrl.u32 %v203, 7
  %v205 = vsub.s32 0, %v204
  %v206 = vrot.slane %v138, %v205
  %v208 = vadd.f32 %v198, %v206
  %v209 = vadd.f32 %v199, %v206
  %v210 = vadd.f32 %v200, %v206
  %v211 = vadd.f32 %v201, %v206
  %v212 = vpack.c.bf16 %v209, %v208
  %v213 = vpack.c.bf16 %v211, %v210
  %v214 = vld [vmem:[%s7] sm:$0xf]
  %v215 = vld [vmem:[%s7 + $0x4] sm:$0xf]
  %v216 = vld [vmem:[%s7 + $0x8] sm:$0xf]
  %v217 = vld [vmem:[%s7 + $0xc] sm:$0xf]
  %v218 = vld [vmem:[%s8] sm:$0x1]
  %v220 = vlaneseq
  %v221 = vshrl.u32 %v220, 7
  %v222 = vsub.s32 0, %v221
  %v223 = vrot.slane %v218, %v222
  %v229 = vunpack.c.l.b16 %v214
  %v230 = vunpack.c.l.b16 %v215
  %v231 = vunpack.c.l.b16 %v216
  %v232 = vunpack.c.l.b16 %v217
  %v233 = vpack.c.b16 %v230, %v229
  %v234 = vpack.c.b16 %v232, %v231
  %v238 = vsel %vm65, %v212, 0
  %v241 = vsel %vm65, %v213, 0
  %243 = vmatprep.subr.bf16.mxu0 0
  %244 = vmatpush1.bf16.msra.mxu0 %v233
  %245 = vmatprep.subr.bf16.mxu0 0
  %246 = vmatpush1.bf16.msra.mxu0 %v234
  %247 = vmatprep.subr.bf16.mxu0 0
  %248 = vmatpush1.bf16.msra.mxu0 0
  %249 = vmatprep.subr.bf16.mxu0 0
  %250 = vmatpush1.bf16.msra.mxu0 0
  %251 = vmatprep.subr.bf16.mxu0 0
  %252 = vmatpush1.bf16.msra.mxu0 0
  %253 = vmatprep.subr.bf16.mxu0 0
  %254 = vmatpush1.bf16.msra.mxu0 0
  %255 = vmatprep.subr.bf16.mxu0 0
  %256 = vmatpush1.bf16.msra.mxu0 0
  %257 = vmatprep.subr.bf16.mxu0 0
  %258 = vmatpush1.bf16.msra.mxu0 0
  %259 = vmatprep.subr.bf16.mxu0 0
  %260 = vmatpush1.bf16.msra.mxu0 0
  %261 = vmatprep.subr.bf16.mxu0 0
  %262 = vmatpush1.bf16.msra.mxu0 0
  %263 = vmatprep.subr.bf16.mxu0 0
  %264 = vmatpush1.bf16.msra.mxu0 0
  %265 = vmatprep.subr.bf16.mxu0 0
  %266 = vmatpush1.bf16.msra.mxu0 0
  %267 = vmatprep.subr.bf16.mxu0 0
  %268 = vmatpush1.bf16.msra.mxu0 0
  %269 = vmatprep.subr.bf16.mxu0 0
  %270 = vmatpush1.bf16.msra.mxu0 0
  %271 = vmatprep.subr.bf16.mxu0 0
  %272 = vmatpush1.bf16.msra.mxu0 0
  %273 = vmatprep.subr.bf16.mxu0 0
  %274 = vmatpush1.bf16.msra.mxu0 0
  %275 = vmatprep.mubr.bf16.mxu0 0
  %276 = vmatmul.mubr.bf16.gmra.mrb[0].mxu0 %v238
  %v277 = vpop.f32.mrb[0].mxu0
  %v278 = vadd.f32 %v223, %v277
  %v279 = vpop.f32.mrb[0].mxu0
  %v280 = vpop.f32.mrb[0].mxu0
  %v281 = vadd.f32 %v223, %v280
  %v282 = vpop.f32.mrb[0].mxu0
  %283 = vmatprep.mubr.bf16.mxu0 0
  %284 = vmatmul.mubr.bf16.gmra.mrb[0].mxu0 %v241
  %v285 = vpop.f32.mrb[0].mxu0
  %v286 = vadd.f32 %v223, %v285
  %v287 = vpop.f32.mrb[0].mxu0
  %v288 = vpop.f32.mrb[0].mxu0
  %v289 = vadd.f32 %v223, %v288
  %v290 = vpop.f32.mrb[0].mxu0
  %291 = vdwg.mxu0
  %v292 = vmul.f32 %v278, 0.5
  %v293 = vmul.f32 %v281, 0.5
  %v294 = vmul.f32 %v286, 0.5
  %v295 = vmul.f32 %v289, 0.5
  %v296 = vmul.f32 %v278, 0.70710677
  %v297 = vmul.f32 %v281, 0.70710677
  %v298 = vmul.f32 %v286, 0.70710677
  %v299 = vmul.f32 %v289, 0.70710677
  %v300 = verf.f32.pop %v296
  %v301 = verf.f32.pop %v297
  %v302 = verf.f32.pop %v298
  %v303 = verf.f32.pop %v299
  %v304 = vadd.f32 %v300, 1.0
  %v305 = vadd.f32 %v301, 1.0
  %v306 = vadd.f32 %v302, 1.0
  %v307 = vadd.f32 %v303, 1.0
  %v308 = vmul.f32 %v292, %v304
  %v309 = vmul.f32 %v293, %v305
  %v310 = vmul.f32 %v294, %v306
  %v311 = vmul.f32 %v295, %v307
  %v312 = vpack.c.bf16 %v309, %v308
  %v313 = vpack.c.bf16 %v311, %v310
  %v314 = vld [vmem:[%s9] sm:$0xf]
  %v315 = vld [vmem:[%s9 + $0x4] sm:$0xf]
  %v316 = vld [vmem:[%s9 + $0x8] sm:$0xf]
  %v317 = vld [vmem:[%s9 + $0xc] sm:$0xf]
  %v318 = vld [vmem:[%s9 + $0x10] sm:$0xf]
  %v319 = vld [vmem:[%s9 + $0x14] sm:$0xf]
  %v320 = vld [vmem:[%s9 + $0x18] sm:$0xf]
  %v321 = vld [vmem:[%s9 + $0x1c] sm:$0xf]
  %v322 = vld [vmem:[%s9 + $0x20] sm:$0xf]
  %v323 = vld [vmem:[%s9 + $0x24] sm:$0xf]
  %v324 = vld [vmem:[%s9 + $0x28] sm:$0xf]
  %v325 = vld [vmem:[%s9 + $0x2c] sm:$0xf]
  %v326 = vld [vmem:[%s9 + $0x30] sm:$0xf]
  %v327 = vld [vmem:[%s9 + $0x34] sm:$0xf]
  %v328 = vld [vmem:[%s9 + $0x38] sm:$0xf]
  %v329 = vld [vmem:[%s9 + $0x3c] sm:$0xf]
  %v346 = vunpack.c.l.b16 %v314
  %v347 = vunpack.c.l.b16 %v315
  %v348 = vunpack.c.l.b16 %v316
  %v349 = vunpack.c.l.b16 %v317
  %v350 = vunpack.c.l.b16 %v318
  %v351 = vunpack.c.l.b16 %v319
  %v352 = vunpack.c.l.b16 %v320
  %v353 = vunpack.c.l.b16 %v321
  %v354 = vunpack.c.l.b16 %v322
  %v355 = vunpack.c.l.b16 %v323
  %v356 = vunpack.c.l.b16 %v324
  %v357 = vunpack.c.l.b16 %v325
  %v358 = vunpack.c.l.b16 %v326
  %v359 = vunpack.c.l.b16 %v327
  %v360 = vunpack.c.l.b16 %v328
  %v361 = vunpack.c.l.b16 %v329
  %v362 = vpack.c.b16 %v347, %v346
  %v363 = vpack.c.b16 %v349, %v348
  %v364 = vpack.c.b16 %v351, %v350
  %v365 = vpack.c.b16 %v353, %v352
  %v366 = vpack.c.b16 %v355, %v354
  %v367 = vpack.c.b16 %v357, %v356
  %v368 = vpack.c.b16 %v359, %v358
  %v369 = vpack.c.b16 %v361, %v360
  %378 = vmatprep.subr.bf16.mxu0 0
  %379 = vmatpush1.bf16.msra.mxu0 %v362
  %380 = vmatprep.subr.bf16.mxu0 0
  %381 = vmatpush1.bf16.msra.mxu0 %v363
  %382 = vmatprep.subr.bf16.mxu0 0
  %383 = vmatpush1.bf16.msra.mxu0 %v364
  %384 = vmatprep.subr.bf16.mxu0 0
  %385 = vmatpush1.bf16.msra.mxu0 %v365
  %386 = vmatprep.subr.bf16.mxu0 0
  %387 = vmatpush1.bf16.msra.mxu0 %v366
  %388 = vmatprep.subr.bf16.mxu0 0
  %389 = vmatpush1.bf16.msra.mxu0 %v367
  %390 = vmatprep.subr.bf16.mxu0 0
  %391 = vmatpush1.bf16.msra.mxu0 %v368
  %392 = vmatprep.subr.bf16.mxu0 0
  %393 = vmatpush1.bf16.msra.mxu0 %v369
  %394 = vmatprep.subr.bf16.mxu0 0
  %395 = vmatpush1.bf16.msra.mxu0 0
  %396 = vmatprep.subr.bf16.mxu0 0
  %397 = vmatpush1.bf16.msra.mxu0 0
  %398 = vmatprep.subr.bf16.mxu0 0
  %399 = vmatpush1.bf16.msra.mxu0 0
  %400 = vmatprep.subr.bf16.mxu0 0
  %401 = vmatpush1.bf16.msra.mxu0 0
  %402 = vmatprep.subr.bf16.mxu0 0
  %403 = vmatpush1.bf16.msra.mxu0 0
  %404 = vmatprep.subr.bf16.mxu0 0
  %405 = vmatpush1.bf16.msra.mxu0 0
  %406 = vmatprep.subr.bf16.mxu0 0
  %407 = vmatpush1.bf16.msra.mxu0 0
  %408 = vmatprep.subr.bf16.mxu0 0
  %409 = vmatpush1.bf16.msra.mxu0 0
  %410 = vmatprep.mubr.bf16.mxu0 0
  %411 = vmatmul.mubr.bf16.gmra.mrb[0].mxu0 %v312
  %v412 = vpop.f32.mrb[0].mxu0
  %v413 = vadd.f32 %v133, %v412
  %v414 = vpop.f32.mrb[0].mxu0
  %v415 = vpop.f32.mrb[0].mxu0
  %v416 = vadd.f32 %v134, %v415
  %v417 = vpop.f32.mrb[0].mxu0
  %418 = vmatprep.mubr.bf16.mxu0 0
  %419 = vmatmul.mubr.bf16.gmra.mrb[0].mxu0 %v313
  %v420 = vpop.f32.mrb[0].mxu0
  %v421 = vadd.f32 %v135, %v420
  %v422 = vpop.f32.mrb[0].mxu0
  %v423 = vpop.f32.mrb[0].mxu0
  %v424 = vadd.f32 %v136, %v423
  %v425 = vpop.f32.mrb[0].mxu0
  %426 = vdwg.mxu0
  %427 = vst.msk [vmem:[%s10] sm:$0xff] %vm65, %v413
  %428 = vst.msk [vmem:[%s10 + $0x8] sm:$0xff] %vm65, %v416
  %429 = vst.msk [vmem:[%s10 + $0x10] sm:$0xff] %vm65, %v421
  %430 = vst.msk [vmem:[%s10 + $0x18] sm:$0xff] %vm65, %v424
  // Predicated region
  $region42: #{afnonet_forward.11} parent=0 // pred_check
    _
  $region43: #{afnonet_forward.11} parent=0 // pred_check_branch
    %432 = sbr.rel (0) target = $region45
  $region44: #{afnonet_forward.11} parent=0 // pred_region
    _
  $region45: #{afnonet_forward.11} parent=0 // pred_fallthru
    _
  // Predicated region
  $region46: #{afnonet_forward.11} parent=0 // pred_check
    _
  $region47: #{afnonet_forward.11} parent=0 // pred_check_branch
    %434 = sbr.rel (0) target = $region49
  $region48: #{afnonet_forward.11} parent=0 // pred_region
    _
  $region49: #{afnonet_forward.11} parent=0 // pred_fallthru
    _

</llo_original>
